<compile_context>
chip_gen: v7x
topology: tpu7x:2x2x1
jax: 0.10.0
libtpu: 0.0.40
codegen_flags: <defaults>
</compile_context>

<pallas_src>
import functools

import jax
import jax.numpy as jnp
from jax.experimental import pallas as pl
from jax.experimental.pallas import tpu as pltpu


def _layer_norm(x, gamma, beta, eps=1e-5):
    mu = jnp.mean(x, axis=-1, keepdims=True)
    var = jnp.mean((x - mu) ** 2, axis=-1, keepdims=True)
    return (x - mu) * jax.lax.rsqrt(var + eps) * gamma + beta


def encoder_layer_kernel(
    x_ref,       # (T, C)   f32   tokens of one batch element (lane-dense)
    wqkv_ref,    # (C, 3C)  bf16  fused q/k/v projection (q third pre-scaled)
    bqkv_ref,    # (1, 3C)  f32   fused q/k/v bias (q part pre-scaled)
    wo_ref,      # (C, C)   bf16
    w1_ref,      # (C, F)   bf16
    b1_ref,      # (1, F)   f32
    w2_ref,      # (F, C)   bf16
    vec_ref,     # (6, C)   f32   rows: bo, ln1_g, ln1_b, b2, ln2_g, ln2_b
    out_ref,     # (T, C)
    *,
    num_heads: int,
):
    T, C = x_ref.shape
    H = num_heads
    Dh = C // H
    cd = jnp.bfloat16  # MXU compute dtype; f32 accumulation everywhere

    x = x_ref[...].astype(jnp.float32)                               # (T, C)

    # ---- fused QKV projection (head_dim**-0.5 folded into the Q third) ----
    qkv = jnp.dot(x.astype(cd), wqkv_ref[...],
                  preferred_element_type=jnp.float32) + bqkv_ref[0]  # (T, 3C)
    qkv_b = qkv.astype(cd)            # cast once, reused by all three splits

    def heads(lo):                    # lane slice -> head-major (H, T, Dh)
        return qkv_b[:, lo:lo + C].reshape(T, H, Dh).swapaxes(0, 1)

    qh, kh, vh = heads(0), heads(C), heads(2 * C)

    # ---- self attention, batched over heads (full softmax; T is small) ----
    s = jnp.einsum("hqd,hkd->hqk", qh, kh,
                   preferred_element_type=jnp.float32)               # (H, T, T)
    s = s - jnp.max(s, axis=-1, keepdims=True)
    p = jnp.exp(s)
    # approx reciprocal -> EUP slot; exact division if bit-parity is needed.
    p = p * pl.reciprocal(jnp.sum(p, axis=-1, keepdims=True), approx=True)
    o = jnp.einsum("hqk,hkd->hqd", p.astype(cd), vh,
                   preferred_element_type=jnp.float32)               # (H, T, Dh)

    # merge heads back to lane-dense (T, C), then output projection
    o = o.swapaxes(0, 1).reshape(T, C)
    attn = jnp.dot(o.astype(cd), wo_ref[...],
                   preferred_element_type=jnp.float32) + vec_ref[0]  # + bo

    # residual + LayerNorm (dropout is identity in eval mode)
    x1 = _layer_norm(x + attn, vec_ref[1], vec_ref[2])

    # ---- feed-forward ----
    h1 = jnp.maximum(
        jnp.dot(x1.astype(cd), w1_ref[...],
                preferred_element_type=jnp.float32) + b1_ref[0], 0.0)  # relu
    h2 = jnp.dot(h1.astype(cd), w2_ref[...],
                 preferred_element_type=jnp.float32) + vec_ref[3]      # + b2
    y = _layer_norm(x1 + h2, vec_ref[4], vec_ref[5])                   # (T, C)

    out_ref[...] = y.astype(out_ref.dtype)


def _pack_params(params, num_heads):
    """Fuse QKV, fold in attention scaling, pack small params, cast weights."""
    C = params["wq"].shape[0]
    scale = (C // num_heads) ** -0.5
    wqkv = jnp.concatenate(
        [params["wq"] * scale, params["wk"], params["wv"]], axis=1
    ).astype(jnp.bfloat16)                                           # (C, 3C)
    bqkv = jnp.concatenate(
        [params["bq"] * scale, params["bk"], params["bv"]], axis=1)  # (1, 3C)
    vecs = jnp.concatenate(
        [params["bo"], params["ln1_g"], params["ln1_b"],
         params["b2"], params["ln2_g"], params["ln2_b"]], axis=0)    # (6, C)
    return (
        wqkv,
        bqkv,
        params["wo"].astype(jnp.bfloat16),
        params["w1"].astype(jnp.bfloat16),
        params["b1"],
        params["w2"].astype(jnp.bfloat16),
        vecs,
    )


def transformer_sentence_encoder_layer(x_tbc, params, num_heads):
    """x_tbc: (T, B, C) float32.  Returns (out (T, B, C), attn=None)."""
    T, B, C = x_tbc.shape
    F = params["w1"].shape[1]
    packed = _pack_params(params, num_heads)

    # Layout plumbing stays in the wrapper (XLA HBM transpose): the kernel
    # consumes and produces lane-dense (T, C) tiles per batch element.
    x_btc = jnp.transpose(x_tbc, (1, 0, 2))                          # (B, T, C)

    def resident(arr):
        # Constant index_map -> same block every grid step -> stays in VMEM.
        nd = arr.ndim
        return pl.BlockSpec(arr.shape, lambda b, _nd=nd: (0,) * _nd)

    in_specs = [pl.BlockSpec((pl.Squeezed(), T, C), lambda b: (b, 0, 0))]
    in_specs += [resident(a) for a in packed]
    out_specs = pl.BlockSpec((pl.Squeezed(), T, C), lambda b: (b, 0, 0))

    # Advisory cost hint for XLA scheduling around the custom call.
    flops = B * (8 * T * C * C + 4 * T * T * C + 4 * T * C * F)
    transcendentals = B * (num_heads * T * T + num_heads * T + 2 * T)
    weight_bytes = sum(int(a.size) * a.dtype.itemsize for a in packed)
    bytes_accessed = 2 * B * T * C * 4 + weight_bytes

    out_btc = pl.pallas_call(
        functools.partial(encoder_layer_kernel, num_heads=num_heads),
        out_shape=jax.ShapeDtypeStruct((B, T, C), x_tbc.dtype),
        grid=(B,),
        in_specs=in_specs,
        out_specs=out_specs,
        compiler_params=pltpu.CompilerParams(
            # batch axis is independent -> shard across v7x's two TensorCores
            dimension_semantics=("parallel",),
            # plenty for these shapes; re-derive per chip for production C/F
            # (raise toward 64-100 MiB on v5e/v6e, keep <=~48 MiB on v7x).
            vmem_limit_bytes=32 * 1024 * 1024),
        cost_estimate=pl.CostEstimate(
            flops=flops, transcendentals=transcendentals,
            bytes_accessed=bytes_accessed),
    )(x_btc, *packed)

    # back to the original fairseq (T, B, C) layout in the wrapper
    return jnp.transpose(out_btc, (1, 0, 2)), None  # need_weights=False


def init_params(key, embed_dim, ffn_dim):
    ks = jax.random.split(key, 8)
    s = 0.02
    C, F = embed_dim, ffn_dim
    return {
        # projection weights stored (in, out) so the kernel does x @ W + b
        "wq": s * jax.random.normal(ks[0], (C, C), jnp.float32),
        "bq": jnp.zeros((1, C), jnp.float32),
        "wk": s * jax.random.normal(ks[1], (C, C), jnp.float32),
        "bk": jnp.zeros((1, C), jnp.float32),
        "wv": s * jax.random.normal(ks[2], (C, C), jnp.float32),
        "bv": jnp.zeros((1, C), jnp.float32),
        "wo": s * jax.random.normal(ks[3], (C, C), jnp.float32),
        "bo": jnp.zeros((1, C), jnp.float32),
        "ln1_g": jnp.ones((1, C), jnp.float32),
        "ln1_b": jnp.zeros((1, C), jnp.float32),
        "w1": s * jax.random.normal(ks[4], (C, F), jnp.float32),
        "b1": jnp.zeros((1, F), jnp.float32),
        "w2": s * jax.random.normal(ks[5], (F, C), jnp.float32),
        "b2": jnp.zeros((1, C), jnp.float32),
        "ln2_g": jnp.ones((1, C), jnp.float32),
        "ln2_b": jnp.zeros((1, C), jnp.float32),
    }


def _reference(x_tbc, p, num_heads):
    """Pure-JAX f32 reference of the same forward (eval mode)."""
    T, B, C = x_tbc.shape
    Dh = C // num_heads
    x = jnp.transpose(x_tbc, (1, 0, 2))  # (B, T, C)
    q = (x @ p["wq"] + p["bq"][0]) * (Dh ** -0.5)
    k = x @ p["wk"] + p["bk"][0]
    v = x @ p["wv"] + p["bv"][0]
    qh = q.reshape(B, T, num_heads, Dh).transpose(0, 2, 1, 3)
    kh = k.reshape(B, T, num_heads, Dh).transpose(0, 2, 1, 3)
    vh = v.reshape(B, T, num_heads, Dh).transpose(0, 2, 1, 3)
    s = jnp.einsum("bhqd,bhkd->bhqk", qh, kh)
    pattn = jax.nn.softmax(s, axis=-1)
    o = jnp.einsum("bhqk,bhkd->bhqd", pattn, vh)
    o = o.transpose(0, 2, 1, 3).reshape(B, T, C)
    o = o @ p["wo"] + p["bo"][0]
    x = _layer_norm(x + o, p["ln1_g"][0], p["ln1_b"][0])
    res = x
    h = jnp.maximum(x @ p["w1"] + p["b1"][0], 0.0)
    h = h @ p["w2"] + p["b2"][0]
    x = _layer_norm(res + h, p["ln2_g"][0], p["ln2_b"][0])
    return jnp.transpose(x, (1, 0, 2))


if __name__ == "__main__":
    T, B, C, H, FFN = 8, 2, 32, 4, 64
    key = jax.random.PRNGKey(0)
    kx, kp = jax.random.split(key)
    x = jax.random.normal(kx, (T, B, C), jnp.float32)
    params = init_params(kp, C, FFN)

    out, attn = transformer_sentence_encoder_layer(x, params, num_heads=H)
    out = jax.block_until_ready(out)

    ref = _reference(x, params, H)
    assert out.shape == (T, B, C)
    assert attn is None
    max_err = jnp.max(jnp.abs(out - ref))
    # bf16 MXU inputs + approx reciprocal -> compare against f32 ref with a
    # correspondingly looser tolerance.
    assert jnp.allclose(out, ref, atol=1e-2, rtol=1e-2), (
        f"mismatch vs JAX reference (max abs err {max_err})")

    print("KERNEL_OK")
</pallas_src>

<mosaic_0001>
module attributes {stable_mosaic.version = 11 : i64} {
  func.func @encoder_layer_kernel(%arg0: i32, %arg1: memref<1x8x32xf32, #tpu.memory_space<vmem>>, %arg2: memref<32x96xbf16, #tpu.memory_space<vmem>>, %arg3: memref<1x96xf32, #tpu.memory_space<vmem>>, %arg4: memref<32x32xbf16, #tpu.memory_space<vmem>>, %arg5: memref<32x64xbf16, #tpu.memory_space<vmem>>, %arg6: memref<1x64xf32, #tpu.memory_space<vmem>>, %arg7: memref<64x32xbf16, #tpu.memory_space<vmem>>, %arg8: memref<6x32xf32, #tpu.memory_space<vmem>>, %arg9: memref<1x8x32xf32, #tpu.memory_space<vmem>>) attributes {dimension_semantics = [#tpu.dimension_semantics<parallel>], iteration_bounds = array<i64: 2>, scalar_prefetch = 0 : i64, scratch_operands = 0 : i64, tpu.core_type = #tpu.core_type<tc>, window_params = [{transform_indices = @transform_0, window_bounds = array<i64: 1, 8, 32>}, {pipeline_mode = #tpu.pipeline_mode<synchronous>, transform_indices = @transform_1, window_bounds = array<i64: 32, 96>}, {pipeline_mode = #tpu.pipeline_mode<synchronous>, transform_indices = @transform_2, window_bounds = array<i64: 1, 96>}, {pipeline_mode = #tpu.pipeline_mode<synchronous>, transform_indices = @transform_3, window_bounds = array<i64: 32, 32>}, {pipeline_mode = #tpu.pipeline_mode<synchronous>, transform_indices = @transform_4, window_bounds = array<i64: 32, 64>}, {pipeline_mode = #tpu.pipeline_mode<synchronous>, transform_indices = @transform_5, window_bounds = array<i64: 1, 64>}, {pipeline_mode = #tpu.pipeline_mode<synchronous>, transform_indices = @transform_6, window_bounds = array<i64: 64, 32>}, {pipeline_mode = #tpu.pipeline_mode<synchronous>, transform_indices = @transform_7, window_bounds = array<i64: 6, 32>}, {transform_indices = @transform_8, window_bounds = array<i64: 1, 8, 32>}]} {
    %c0 = arith.constant 0 : index
    %c0_0 = arith.constant 0 : index
    %c0_1 = arith.constant 0 : index
    %0 = vector.load %arg1[%c0, %c0_0, %c0_1] : memref<1x8x32xf32, #tpu.memory_space<vmem>>, vector<1x8x32xf32>
    %1 = vector.shape_cast %0 : vector<1x8x32xf32> to vector<8x32xf32>
    %2 = arith.truncf %1 : vector<8x32xf32> to vector<8x32xbf16>
    %c0_2 = arith.constant 0 : index
    %c0_3 = arith.constant 0 : index
    %3 = vector.load %arg2[%c0_2, %c0_3] : memref<32x96xbf16, #tpu.memory_space<vmem>>, vector<32x96xbf16>
    %cst = arith.constant dense<0.000000e+00> : vector<8x96xf32>
    %4 = tpu.matmul %2, %3, %cst {dimension_numbers = #tpu.dot_dimension_numbers<[1], [0], [0], [1], [0, 0, 1, 1], [], []>} : vector<8x32xbf16>, vector<32x96xbf16>, vector<8x96xf32> -> vector<8x96xf32>
    %c0_4 = arith.constant 0 : index
    %c0_5 = arith.constant 0 : index
    %5 = vector.load %arg3[%c0_4, %c0_5] : memref<1x96xf32, #tpu.memory_space<vmem>>, vector<1x96xf32>
    %6 = vector.shape_cast %5 : vector<1x96xf32> to vector<96xf32>
    %7 = vector.shape_cast %6 : vector<96xf32> to vector<1x96xf32>
    %8 = vector.broadcast %7 : vector<1x96xf32> to vector<8x96xf32>
    %9 = arith.addf %4, %8 : vector<8x96xf32>
    %10 = arith.truncf %9 : vector<8x96xf32> to vector<8x96xbf16>
    %11 = vector.extract_strided_slice %10 {offsets = [0, 0], sizes = [8, 32], strides = [1, 1]} : vector<8x96xbf16> to vector<8x32xbf16>
    %12 = vector.shape_cast %11 : vector<8x32xbf16> to vector<8x4x8xbf16>
    %13 = tpu.transpose %12, [1, 0, 2] : vector<8x4x8xbf16> -> vector<4x8x8xbf16>
    %14 = vector.extract_strided_slice %10 {offsets = [0, 32], sizes = [8, 32], strides = [1, 1]} : vector<8x96xbf16> to vector<8x32xbf16>
    %15 = vector.shape_cast %14 : vector<8x32xbf16> to vector<8x4x8xbf16>
    %16 = tpu.transpose %15, [1, 0, 2] : vector<8x4x8xbf16> -> vector<4x8x8xbf16>
    %17 = vector.extract_strided_slice %10 {offsets = [0, 64], sizes = [8, 32], strides = [1, 1]} : vector<8x96xbf16> to vector<8x32xbf16>
    %18 = vector.shape_cast %17 : vector<8x32xbf16> to vector<8x4x8xbf16>
    %19 = tpu.transpose %18, [1, 0, 2] : vector<8x4x8xbf16> -> vector<4x8x8xbf16>
    "tpu.trace_start"() <{level = 10 : i32, message = "hqd,hkd->hqk"}> : () -> ()
    %cst_6 = arith.constant dense<0.000000e+00> : vector<4x8x8xf32>
    %20 = tpu.matmul %13, %16, %cst_6 {dimension_numbers = #tpu.dot_dimension_numbers<[2], [2], [1], [1], [0, 0, 0, 1, 1, 1], [0], [0]>} : vector<4x8x8xbf16>, vector<4x8x8xbf16>, vector<4x8x8xf32> -> vector<4x8x8xf32>
    "tpu.trace_stop"() : () -> ()
    %cst_7 = arith.constant dense<0xFF800000> : vector<4x8xf32>
    %21 = vector.multi_reduction <maximumf>, %20, %cst_7 [2] : vector<4x8x8xf32> to vector<4x8xf32>
    %22 = vector.shape_cast %21 : vector<4x8xf32> to vector<4x8x1xf32>
    %23 = vector.broadcast %22 : vector<4x8x1xf32> to vector<4x8x8xf32>
    %24 = arith.subf %20, %23 : vector<4x8x8xf32>
    %25 = math.exp %24 : vector<4x8x8xf32>
    %cst_8 = arith.constant dense<0.000000e+00> : vector<4x8xf32>
    %26 = vector.multi_reduction <add>, %25, %cst_8 [2] : vector<4x8x8xf32> to vector<4x8xf32>
    %27 = vector.shape_cast %26 : vector<4x8xf32> to vector<4x8x1xf32>
    %28 = tpu.reciprocal %27 {approx = true} : vector<4x8x1xf32> -> vector<4x8x1xf32>
    %29 = vector.broadcast %28 : vector<4x8x1xf32> to vector<4x8x8xf32>
    %30 = arith.mulf %25, %29 : vector<4x8x8xf32>
    %31 = arith.truncf %30 : vector<4x8x8xf32> to vector<4x8x8xbf16>
    "tpu.trace_start"() <{level = 10 : i32, message = "hqk,hkd->hqd"}> : () -> ()
    %cst_9 = arith.constant dense<0.000000e+00> : vector<4x8x8xf32>
    %32 = tpu.matmul %31, %19, %cst_9 {dimension_numbers = #tpu.dot_dimension_numbers<[2], [1], [1], [2], [0, 0, 0, 1, 1, 2], [0], [0]>} : vector<4x8x8xbf16>, vector<4x8x8xbf16>, vector<4x8x8xf32> -> vector<4x8x8xf32>
    "tpu.trace_stop"() : () -> ()
    %33 = tpu.transpose %32, [1, 0, 2] : vector<4x8x8xf32> -> vector<8x4x8xf32>
    %34 = vector.shape_cast %33 : vector<8x4x8xf32> to vector<8x32xf32>
    %35 = arith.truncf %34 : vector<8x32xf32> to vector<8x32xbf16>
    %c0_10 = arith.constant 0 : index
    %c0_11 = arith.constant 0 : index
    %36 = vector.load %arg4[%c0_10, %c0_11] : memref<32x32xbf16, #tpu.memory_space<vmem>>, vector<32x32xbf16>
    %cst_12 = arith.constant dense<0.000000e+00> : vector<8x32xf32>
    %37 = tpu.matmul %35, %36, %cst_12 {dimension_numbers = #tpu.dot_dimension_numbers<[1], [0], [0], [1], [0, 0, 1, 1], [], []>} : vector<8x32xbf16>, vector<32x32xbf16>, vector<8x32xf32> -> vector<8x32xf32>
    %c0_13 = arith.constant 0 : index
    %c0_14 = arith.constant 0 : index
    %38 = vector.load %arg8[%c0_13, %c0_14] : memref<6x32xf32, #tpu.memory_space<vmem>>, vector<1x32xf32>
    %39 = vector.shape_cast %38 : vector<1x32xf32> to vector<32xf32>
    %40 = vector.shape_cast %39 : vector<32xf32> to vector<1x32xf32>
    %41 = vector.broadcast %40 : vector<1x32xf32> to vector<8x32xf32>
    %42 = arith.addf %37, %41 : vector<8x32xf32>
    %43 = arith.addf %1, %42 : vector<8x32xf32>
    %c1 = arith.constant 1 : index
    %c0_15 = arith.constant 0 : index
    %44 = vector.load %arg8[%c1, %c0_15] : memref<6x32xf32, #tpu.memory_space<vmem>>, vector<1x32xf32>
    %45 = vector.shape_cast %44 : vector<1x32xf32> to vector<32xf32>
    %c2 = arith.constant 2 : index
    %c0_16 = arith.constant 0 : index
    %46 = vector.load %arg8[%c2, %c0_16] : memref<6x32xf32, #tpu.memory_space<vmem>>, vector<1x32xf32>
    %47 = vector.shape_cast %46 : vector<1x32xf32> to vector<32xf32>
    %cst_17 = arith.constant dense<0.000000e+00> : vector<8xf32>
    %48 = vector.multi_reduction <add>, %43, %cst_17 [1] : vector<8x32xf32> to vector<8xf32>
    %49 = vector.shape_cast %48 : vector<8xf32> to vector<8x1xf32>
    %cst_18 = arith.constant 3.200000e+01 : f32
    %50 = vector.broadcast %cst_18 : f32 to vector<8x1xf32>
    %51 = arith.divf %49, %50 : vector<8x1xf32>
    %52 = vector.broadcast %51 : vector<8x1xf32> to vector<8x32xf32>
    %53 = arith.subf %43, %52 : vector<8x32xf32>
    %54 = arith.mulf %53, %53 : vector<8x32xf32>
    %cst_19 = arith.constant dense<0.000000e+00> : vector<8xf32>
    %55 = vector.multi_reduction <add>, %54, %cst_19 [1] : vector<8x32xf32> to vector<8xf32>
    %56 = vector.shape_cast %55 : vector<8xf32> to vector<8x1xf32>
    %cst_20 = arith.constant 3.200000e+01 : f32
    %57 = vector.broadcast %cst_20 : f32 to vector<8x1xf32>
    %58 = arith.divf %56, %57 : vector<8x1xf32>
    %59 = vector.broadcast %51 : vector<8x1xf32> to vector<8x32xf32>
    %60 = arith.subf %43, %59 : vector<8x32xf32>
    %cst_21 = arith.constant 9.99999974E-6 : f32
    %61 = vector.broadcast %cst_21 : f32 to vector<8x1xf32>
    %62 = arith.addf %58, %61 : vector<8x1xf32>
    %63 = math.rsqrt %62 : vector<8x1xf32>
    %64 = vector.broadcast %63 : vector<8x1xf32> to vector<8x32xf32>
    %65 = arith.mulf %60, %64 : vector<8x32xf32>
    %66 = vector.shape_cast %45 : vector<32xf32> to vector<1x32xf32>
    %67 = vector.broadcast %66 : vector<1x32xf32> to vector<8x32xf32>
    %68 = arith.mulf %65, %67 : vector<8x32xf32>
    %69 = vector.shape_cast %47 : vector<32xf32> to vector<1x32xf32>
    %70 = vector.broadcast %69 : vector<1x32xf32> to vector<8x32xf32>
    %71 = arith.addf %68, %70 : vector<8x32xf32>
    %72 = arith.truncf %71 : vector<8x32xf32> to vector<8x32xbf16>
    %c0_22 = arith.constant 0 : index
    %c0_23 = arith.constant 0 : index
    %73 = vector.load %arg5[%c0_22, %c0_23] : memref<32x64xbf16, #tpu.memory_space<vmem>>, vector<32x64xbf16>
    %cst_24 = arith.constant dense<0.000000e+00> : vector<8x64xf32>
    %74 = tpu.matmul %72, %73, %cst_24 {dimension_numbers = #tpu.dot_dimension_numbers<[1], [0], [0], [1], [0, 0, 1, 1], [], []>} : vector<8x32xbf16>, vector<32x64xbf16>, vector<8x64xf32> -> vector<8x64xf32>
    %c0_25 = arith.constant 0 : index
    %c0_26 = arith.constant 0 : index
    %75 = vector.load %arg6[%c0_25, %c0_26] : memref<1x64xf32, #tpu.memory_space<vmem>>, vector<1x64xf32>
    %76 = vector.shape_cast %75 : vector<1x64xf32> to vector<64xf32>
    %77 = vector.shape_cast %76 : vector<64xf32> to vector<1x64xf32>
    %78 = vector.broadcast %77 : vector<1x64xf32> to vector<8x64xf32>
    %79 = arith.addf %74, %78 : vector<8x64xf32>
    %cst_27 = arith.constant 0.000000e+00 : f32
    %80 = vector.broadcast %cst_27 : f32 to vector<8x64xf32>
    %81 = arith.maximumf %79, %80 : vector<8x64xf32>
    %82 = arith.truncf %81 : vector<8x64xf32> to vector<8x64xbf16>
    %c0_28 = arith.constant 0 : index
    %c0_29 = arith.constant 0 : index
    %83 = vector.load %arg7[%c0_28, %c0_29] : memref<64x32xbf16, #tpu.memory_space<vmem>>, vector<64x32xbf16>
    %cst_30 = arith.constant dense<0.000000e+00> : vector<8x32xf32>
    %84 = tpu.matmul %82, %83, %cst_30 {dimension_numbers = #tpu.dot_dimension_numbers<[1], [0], [0], [1], [0, 0, 1, 1], [], []>} : vector<8x64xbf16>, vector<64x32xbf16>, vector<8x32xf32> -> vector<8x32xf32>
    %c3 = arith.constant 3 : index
    %c0_31 = arith.constant 0 : index
    %85 = vector.load %arg8[%c3, %c0_31] : memref<6x32xf32, #tpu.memory_space<vmem>>, vector<1x32xf32>
    %86 = vector.shape_cast %85 : vector<1x32xf32> to vector<32xf32>
    %87 = vector.shape_cast %86 : vector<32xf32> to vector<1x32xf32>
    %88 = vector.broadcast %87 : vector<1x32xf32> to vector<8x32xf32>
    %89 = arith.addf %84, %88 : vector<8x32xf32>
    %90 = arith.addf %71, %89 : vector<8x32xf32>
    %c4 = arith.constant 4 : index
    %c0_32 = arith.constant 0 : index
    %91 = vector.load %arg8[%c4, %c0_32] : memref<6x32xf32, #tpu.memory_space<vmem>>, vector<1x32xf32>
    %92 = vector.shape_cast %91 : vector<1x32xf32> to vector<32xf32>
    %c5 = arith.constant 5 : index
    %c0_33 = arith.constant 0 : index
    %93 = vector.load %arg8[%c5, %c0_33] : memref<6x32xf32, #tpu.memory_space<vmem>>, vector<1x32xf32>
    %94 = vector.shape_cast %93 : vector<1x32xf32> to vector<32xf32>
    %cst_34 = arith.constant dense<0.000000e+00> : vector<8xf32>
    %95 = vector.multi_reduction <add>, %90, %cst_34 [1] : vector<8x32xf32> to vector<8xf32>
    %96 = vector.shape_cast %95 : vector<8xf32> to vector<8x1xf32>
    %cst_35 = arith.constant 3.200000e+01 : f32
    %97 = vector.broadcast %cst_35 : f32 to vector<8x1xf32>
    %98 = arith.divf %96, %97 : vector<8x1xf32>
    %99 = vector.broadcast %98 : vector<8x1xf32> to vector<8x32xf32>
    %100 = arith.subf %90, %99 : vector<8x32xf32>
    %101 = arith.mulf %100, %100 : vector<8x32xf32>
    %cst_36 = arith.constant dense<0.000000e+00> : vector<8xf32>
    %102 = vector.multi_reduction <add>, %101, %cst_36 [1] : vector<8x32xf32> to vector<8xf32>
    %103 = vector.shape_cast %102 : vector<8xf32> to vector<8x1xf32>
    %cst_37 = arith.constant 3.200000e+01 : f32
    %104 = vector.broadcast %cst_37 : f32 to vector<8x1xf32>
    %105 = arith.divf %103, %104 : vector<8x1xf32>
    %106 = vector.broadcast %98 : vector<8x1xf32> to vector<8x32xf32>
    %107 = arith.subf %90, %106 : vector<8x32xf32>
    %cst_38 = arith.constant 9.99999974E-6 : f32
    %108 = vector.broadcast %cst_38 : f32 to vector<8x1xf32>
    %109 = arith.addf %105, %108 : vector<8x1xf32>
    %110 = math.rsqrt %109 : vector<8x1xf32>
    %111 = vector.broadcast %110 : vector<8x1xf32> to vector<8x32xf32>
    %112 = arith.mulf %107, %111 : vector<8x32xf32>
    %113 = vector.shape_cast %92 : vector<32xf32> to vector<1x32xf32>
    %114 = vector.broadcast %113 : vector<1x32xf32> to vector<8x32xf32>
    %115 = arith.mulf %112, %114 : vector<8x32xf32>
    %116 = vector.shape_cast %94 : vector<32xf32> to vector<1x32xf32>
    %117 = vector.broadcast %116 : vector<1x32xf32> to vector<8x32xf32>
    %118 = arith.addf %115, %117 : vector<8x32xf32>
    %c0_39 = arith.constant 0 : index
    %c0_40 = arith.constant 0 : index
    %c0_41 = arith.constant 0 : index
    %119 = vector.load %arg9[%c0_39, %c0_40, %c0_41] : memref<1x8x32xf32, #tpu.memory_space<vmem>>, vector<1x8x32xf32>
    %120 = vector.shape_cast %119 : vector<1x8x32xf32> to vector<8x32xf32>
    %121 = vector.shape_cast %118 : vector<8x32xf32> to vector<1x8x32xf32>
    tpu.vector_store %arg9[%c0_39, %c0_40, %c0_41], %121 {strides = array<i32>} : memref<1x8x32xf32, #tpu.memory_space<vmem>>, vector<1x8x32xf32>,
    return
  }
  func.func @transform_0(%arg0: i32) -> (i32, i32, i32) {
    %c0_i32 = arith.constant 0 : i32
    %c0_i32_0 = arith.constant 0 : i32
    %c0_i32_1 = arith.constant 0 : i32
    return %arg0, %c0_i32, %c0_i32_0 : i32, i32, i32
  }
  func.func @transform_1(%arg0: i32) -> (i32, i32) {
    %c0_i32 = arith.constant 0 : i32
    %c0_i32_0 = arith.constant 0 : i32
    %c0_i32_1 = arith.constant 0 : i32
    return %c0_i32, %c0_i32_0 : i32, i32
  }
  func.func @transform_2(%arg0: i32) -> (i32, i32) {
    %c0_i32 = arith.constant 0 : i32
    %c0_i32_0 = arith.constant 0 : i32
    %c0_i32_1 = arith.constant 0 : i32
    return %c0_i32, %c0_i32_0 : i32, i32
  }
  func.func @transform_3(%arg0: i32) -> (i32, i32) {
    %c0_i32 = arith.constant 0 : i32
    %c0_i32_0 = arith.constant 0 : i32
    %c0_i32_1 = arith.constant 0 : i32
    return %c0_i32, %c0_i32_0 : i32, i32
  }
  func.func @transform_4(%arg0: i32) -> (i32, i32) {
    %c0_i32 = arith.constant 0 : i32
    %c0_i32_0 = arith.constant 0 : i32
    %c0_i32_1 = arith.constant 0 : i32
    return %c0_i32, %c0_i32_0 : i32, i32
  }
  func.func @transform_5(%arg0: i32) -> (i32, i32) {
    %c0_i32 = arith.constant 0 : i32
    %c0_i32_0 = arith.constant 0 : i32
    %c0_i32_1 = arith.constant 0 : i32
    return %c0_i32, %c0_i32_0 : i32, i32
  }
  func.func @transform_6(%arg0: i32) -> (i32, i32) {
    %c0_i32 = arith.constant 0 : i32
    %c0_i32_0 = arith.constant 0 : i32
    %c0_i32_1 = arith.constant 0 : i32
    return %c0_i32, %c0_i32_0 : i32, i32
  }
  func.func @transform_7(%arg0: i32) -> (i32, i32) {
    %c0_i32 = arith.constant 0 : i32
    %c0_i32_0 = arith.constant 0 : i32
    %c0_i32_1 = arith.constant 0 : i32
    return %c0_i32, %c0_i32_0 : i32, i32
  }
  func.func @transform_8(%arg0: i32) -> (i32, i32, i32) {
    %c0_i32 = arith.constant 0 : i32
    %c0_i32_0 = arith.constant 0 : i32
    %c0_i32_1 = arith.constant 0 : i32
    return %arg0, %c0_i32, %c0_i32_0 : i32, i32, i32
  }
}

</mosaic_0001>

<llo_original>
// kernel: tpu_custom_call.1
$region0: #{tpu_custom_call.1}
  #allocation0 [shape = 'u32[]', space=smem, size = 0x4, offset = 0x4, fixed_abs, tag = 'smem constant byte address 0x4 - core index']
  #allocation1 [shape = 'u32[144,128]{1,0:T(1,128)}', space=vmem, size = 0x12000, scoped, tag = 'internal scratch']
  %s0 = inlined_call_operand.vmem [shape: f32[2,8,32], index: 0, kind: input, shape index: {}]
  %s1 = inlined_call_operand.vmem [shape: bf16[32,96], index: 1, kind: input, shape index: {}]
  %s2 = inlined_call_operand.vmem [shape: f32[1,96], index: 2, kind: input, shape index: {}]
  %s3 = inlined_call_operand.vmem [shape: bf16[32,32], index: 3, kind: input, shape index: {}]
  %s4 = inlined_call_operand.hbm [shape: bf16[32,64], index: 4, kind: input, shape index: {}]
  %s5 = inlined_call_operand.vmem [shape: f32[1,64], index: 5, kind: input, shape index: {}]
  %s6 = inlined_call_operand.vmem [shape: bf16[64,32], index: 6, kind: input, shape index: {}]
  %s7 = inlined_call_operand.vmem [shape: f32[6,32], index: 7, kind: input, shape index: {}]
  %s8 = inlined_call_operand.hbm [shape: f32[2,8,32], index: 8, kind: output, shape index: {}]
  %s9 = sld [smem:[#allocation0]]
  $region69: #{tpu_custom_call.1} parent=0
    _
  %s11 = ssub.s32 1, %s9
  %s12 = scalar_select 0, %s11, %s9
  $region1: #{tpu_custom_call.1} parent=0
    #allocation2 [shape = 'u8[8192]{0}', space=vmem, size = 0x2000, scoped, tag = 'input window, operand 4, single buffered']
    #allocation3 [shape = 's32[2]{0}', space=sflag, size = 0x8, scoped, tag = 'scoped memory for tpu_custom_call.1']
    #allocation4 [shape = 's32[2]{0}', space=sflag, size = 0x8, scoped, tag = 'scoped memory for tpu_custom_call.1']
    #allocation5 [shape = 'u8[8192]{0}', space=vmem, size = 0x2000, scoped, tag = 'output window, operand 0']
    %13 = vsyncpa [#allocation3], 0
    %14 = vsyncpa [#allocation4], 0
    %s15 = scalar_lea.sflag [#allocation4], 1
    %16 = vsyncpa %s15, 0
    loop: start=0, step=1, limit=4
    $region2: #{tpu_custom_call.1} parent=1 // loop_pre_header
      _
    $region3: #{tpu_custom_call.1} parent=1 // loop_header
      %s18 = sphi 0, %s22
      %p19 = scmp.ge.s32.totalorder %s18, 4
      %s28 = sphi 0, %s30
      %s31 = sphi 0, %s28
      %s32 = sphi 0, %s31
      %s48 = sphi 0, %s32
      %s52 = sphi 0, %s52
      %s54 = sphi 0, %s52
      %s55 = sphi 0, %s54
      %s69 = sphi 0, %s55
      %s73 = sphi 0, %s73
      %s75 = sphi 0, %s73
      %s76 = sphi 0, %s75
      %s90 = sphi 0, %s76
      %s94 = sphi 0, %s94
      %s96 = sphi 0, %s94
      %s97 = sphi 0, %s96
      %s111 = sphi 0, %s97
      %s115 = sphi 0, %s115
      %s117 = sphi 0, %s115
      %s118 = sphi 0, %s117
      %s132 = sphi 0, %s118
      %s136 = sphi 0, %s136
      %s138 = sphi 0, %s136
      %s139 = sphi 0, %s138
      %s153 = sphi 0, %s139
      %s157 = sphi 0, %s157
      %s159 = sphi 0, %s157
      %s160 = sphi 0, %s159
      %s174 = sphi 0, %s160
      %s178 = sphi 0, %s178
      %s180 = sphi 0, %s178
      %s181 = sphi 0, %s180
      %s195 = sphi 0, %s181
      %s201 = sphi 0, %s203
      %s204 = sphi 0, %s201
      %s205 = sphi 0, %s204
      %s221 = sphi 0, %s205
    $region4: #{tpu_custom_call.1} parent=1 // loop_header_branch
      %21 = sbr.rel (%p19) target = $region8
    $region5: #{tpu_custom_call.1} parent=1 // loop_body
      %s23 = ssub.s32 %s18, 1
      %s24 = ssub.s32 %s18, 2
      %s25 = sadd.s32 %s18, 1
      %s26 = ssub.s32 %s18, %s25
      %p27 = scmp.eq.s32.totalorder %s26, 0
      %s29 = sadd.s32 %s28, 1
      %s30 = scalar_select %p27, %s28, %s29
      %p33 = pneg %p27
      %p34 = scmp.eq.s32.totalorder %s18, 1
      %p35 = por %p33, %p34
      %p36 = scmp.ne.s32.totalorder %s28, %s31
      %p37 = scmp.eq.s32.totalorder %s18, 0
      %p38 = por %p36, %p37
      %p39 = scmp.ne.s32.totalorder %s28, %s31
      %p40 = scmp.eq.s32.totalorder %s23, 1
      %p41 = por %p39, %p40
      %p42 = scmp.ne.s32.totalorder %s31, %s32
      %p43 = scmp.eq.s32.totalorder %s23, 0
      %p44 = por %p42, %p43
      %p45 = scmp.ne.s32.totalorder %s31, %s32
      %p46 = scmp.eq.s32.totalorder %s24, 1
      %p47 = por %p45, %p46
      %p49 = scmp.ne.s32.totalorder %s32, %s48
      %p50 = scmp.eq.s32.totalorder %s24, 0
      %p51 = por %p49, %p50
      %s53 = sadd.s32 %s52, 1
      %p56 = scmp.eq.s32.totalorder %s18, 1
      %p57 = scmp.ne.s32.totalorder %s52, %s54
      %p58 = scmp.eq.s32.totalorder %s18, 0
      %p59 = por %p57, %p58
      %p60 = scmp.ne.s32.totalorder %s52, %s54
      %p61 = scmp.eq.s32.totalorder %s23, 1
      %p62 = por %p60, %p61
      %p63 = scmp.ne.s32.totalorder %s54, %s55
      %p64 = scmp.eq.s32.totalorder %s23, 0
      %p65 = por %p63, %p64
      %p66 = scmp.ne.s32.totalorder %s54, %s55
      %p67 = scmp.eq.s32.totalorder %s24, 1
      %p68 = por %p66, %p67
      %p70 = scmp.ne.s32.totalorder %s55, %s69
      %p71 = scmp.eq.s32.totalorder %s24, 0
      %p72 = por %p70, %p71
      %s74 = sadd.s32 %s73, 1
      %p77 = scmp.eq.s32.totalorder %s18, 1
      %p78 = scmp.ne.s32.totalorder %s73, %s75
      %p79 = scmp.eq.s32.totalorder %s18, 0
      %p80 = por %p78, %p79
      %p81 = scmp.ne.s32.totalorder %s73, %s75
      %p82 = scmp.eq.s32.totalorder %s23, 1
      %p83 = por %p81, %p82
      %p84 = scmp.ne.s32.totalorder %s75, %s76
      %p85 = scmp.eq.s32.totalorder %s23, 0
      %p86 = por %p84, %p85
      %p87 = scmp.ne.s32.totalorder %s75, %s76
      %p88 = scmp.eq.s32.totalorder %s24, 1
      %p89 = por %p87, %p88
      %p91 = scmp.ne.s32.totalorder %s76, %s90
      %p92 = scmp.eq.s32.totalorder %s24, 0
      %p93 = por %p91, %p92
      %s95 = sadd.s32 %s94, 1
      %p98 = scmp.eq.s32.totalorder %s18, 1
      %p99 = scmp.ne.s32.totalorder %s94, %s96
      %p100 = scmp.eq.s32.totalorder %s18, 0
      %p101 = por %p99, %p100
      %p102 = scmp.ne.s32.totalorder %s94, %s96
      %p103 = scmp.eq.s32.totalorder %s23, 1
      %p104 = por %p102, %p103
      %p105 = scmp.ne.s32.totalorder %s96, %s97
      %p106 = scmp.eq.s32.totalorder %s23, 0
      %p107 = por %p105, %p106
      %p108 = scmp.ne.s32.totalorder %s96, %s97
      %p109 = scmp.eq.s32.totalorder %s24, 1
      %p110 = por %p108, %p109
      %p112 = scmp.ne.s32.totalorder %s97, %s111
      %p113 = scmp.eq.s32.totalorder %s24, 0
      %p114 = por %p112, %p113
      %s116 = sadd.s32 %s115, 1
      %p119 = scmp.eq.s32.totalorder %s18, 1
      %p120 = scmp.ne.s32.totalorder %s115, %s117
      %p121 = scmp.eq.s32.totalorder %s18, 0
      %p122 = por %p120, %p121
      %p123 = scmp.ne.s32.totalorder %s115, %s117
      %p124 = scmp.eq.s32.totalorder %s23, 1
      %p125 = por %p123, %p124
      %p126 = scmp.ne.s32.totalorder %s117, %s118
      %p127 = scmp.eq.s32.totalorder %s23, 0
      %p128 = por %p126, %p127
      %p129 = scmp.ne.s32.totalorder %s117, %s118
      %p130 = scmp.eq.s32.totalorder %s24, 1
      %p131 = por %p129, %p130
      %p133 = scmp.ne.s32.totalorder %s118, %s132
      %p134 = scmp.eq.s32.totalorder %s24, 0
      %p135 = por %p133, %p134
      %s137 = sadd.s32 %s136, 1
      %p140 = scmp.eq.s32.totalorder %s18, 1
      %p141 = scmp.ne.s32.totalorder %s136, %s138
      %p142 = scmp.eq.s32.totalorder %s18, 0
      %p143 = por %p141, %p142
      %p144 = scmp.ne.s32.totalorder %s136, %s138
      %p145 = scmp.eq.s32.totalorder %s23, 1
      %p146 = por %p144, %p145
      %p147 = scmp.ne.s32.totalorder %s138, %s139
      %p148 = scmp.eq.s32.totalorder %s23, 0
      %p149 = por %p147, %p148
      %p150 = scmp.ne.s32.totalorder %s138, %s139
      %p151 = scmp.eq.s32.totalorder %s24, 1
      %p152 = por %p150, %p151
      %p154 = scmp.ne.s32.totalorder %s139, %s153
      %p155 = scmp.eq.s32.totalorder %s24, 0
      %p156 = por %p154, %p155
      %s158 = sadd.s32 %s157, 1
      %p161 = scmp.eq.s32.totalorder %s18, 1
      %p162 = scmp.ne.s32.totalorder %s157, %s159
      %p163 = scmp.eq.s32.totalorder %s18, 0
      %p164 = por %p162, %p163
      %p165 = scmp.ne.s32.totalorder %s157, %s159
      %p166 = scmp.eq.s32.totalorder %s23, 1
      %p167 = por %p165, %p166
      %p168 = scmp.ne.s32.totalorder %s159, %s160
      %p169 = scmp.eq.s32.totalorder %s23, 0
      %p170 = por %p168, %p169
      %p171 = scmp.ne.s32.totalorder %s159, %s160
      %p172 = scmp.eq.s32.totalorder %s24, 1
      %p173 = por %p171, %p172
      %p175 = scmp.ne.s32.totalorder %s160, %s174
      %p176 = scmp.eq.s32.totalorder %s24, 0
      %p177 = por %p175, %p176
      %s179 = sadd.s32 %s178, 1
      %p182 = scmp.eq.s32.totalorder %s18, 1
      %p183 = scmp.ne.s32.totalorder %s178, %s180
      %p184 = scmp.eq.s32.totalorder %s18, 0
      %p185 = por %p183, %p184
      %p186 = scmp.ne.s32.totalorder %s178, %s180
      %p187 = scmp.eq.s32.totalorder %s23, 1
      %p188 = por %p186, %p187
      %p189 = scmp.ne.s32.totalorder %s180, %s181
      %p190 = scmp.eq.s32.totalorder %s23, 0
      %p191 = por %p189, %p190
      %p192 = scmp.ne.s32.totalorder %s180, %s181
      %p193 = scmp.eq.s32.totalorder %s24, 1
      %p194 = por %p192, %p193
      %p196 = scmp.ne.s32.totalorder %s181, %s195
      %p197 = scmp.eq.s32.totalorder %s24, 0
      %p198 = por %p196, %p197
      %s199 = ssub.s32 %s18, %s25
      %p200 = scmp.eq.s32.totalorder %s199, 0
      %s202 = sadd.s32 %s201, 1
      %s203 = scalar_select %p200, %s201, %s202
      %p206 = pneg %p200
      %p207 = scmp.eq.s32.totalorder %s18, 1
      %p208 = por %p206, %p207
      %p209 = scmp.ne.s32.totalorder %s201, %s204
      %p210 = scmp.eq.s32.totalorder %s18, 0
      %p211 = por %p209, %p210
      %p212 = scmp.ne.s32.totalorder %s201, %s204
      %p213 = scmp.eq.s32.totalorder %s23, 1
      %p214 = por %p212, %p213
      %p215 = scmp.ne.s32.totalorder %s204, %s205
      %p216 = scmp.eq.s32.totalorder %s23, 0
      %p217 = por %p215, %p216
      %p218 = scmp.ne.s32.totalorder %s204, %s205
      %p219 = scmp.eq.s32.totalorder %s24, 1
      %p220 = por %p218, %p219
      %p222 = scmp.ne.s32.totalorder %s205, %s221
      %p223 = scmp.eq.s32.totalorder %s24, 0
      %p224 = por %p222, %p223
      %p225 = scmp.le.s32.totalorder 1, %s18
      %p226 = scmp.lt.s32.totalorder %s18, 3
      %p227 = pnand %p225, %p226
      %p228 = pneg %p227
      // Predicated region
      $region9: #{tpu_custom_call.1} parent=5 // pred_check
        _
      $region10: #{tpu_custom_call.1} parent=5 // pred_check_branch
        %230 = sbr.rel (%p227) target = $region12
      $region11: #{tpu_custom_call.1} parent=5 // pred_region
        %s231 = ssub.s32 %s18, 1
        // Predicated region
        $region13: #{tpu_custom_call.1} parent=11 // pred_check
          %p232 = pneg %p65
        $region14: #{tpu_custom_call.1} parent=11 // pred_check_branch
          %234 = sbr.rel (%p232) target = $region16
        $region15: #{tpu_custom_call.1} parent=11 // pred_region
          _
        $region16: #{tpu_custom_call.1} parent=11 // pred_fallthru
          _
        // Predicated region
        $region17: #{tpu_custom_call.1} parent=11 // pred_check
          %p235 = pneg %p86
        $region18: #{tpu_custom_call.1} parent=11 // pred_check_branch
          %237 = sbr.rel (%p235) target = $region20
        $region19: #{tpu_custom_call.1} parent=11 // pred_region
          _
        $region20: #{tpu_custom_call.1} parent=11 // pred_fallthru
          _
        // Predicated region
        $region21: #{tpu_custom_call.1} parent=11 // pred_check
          %p238 = pneg %p107
        $region22: #{tpu_custom_call.1} parent=11 // pred_check_branch
          %240 = sbr.rel (%p238) target = $region24
        $region23: #{tpu_custom_call.1} parent=11 // pred_region
          _
        $region24: #{tpu_custom_call.1} parent=11 // pred_fallthru
          _
        // Predicated region
        $region25: #{tpu_custom_call.1} parent=11 // pred_check
          %p241 = pneg %p128
        $region26: #{tpu_custom_call.1} parent=11 // pred_check_branch
          %243 = sbr.rel (%p241) target = $region28
        $region27: #{tpu_custom_call.1} parent=11 // pred_region
          %s245 = ssub.s32 256, 256
          %246 = vsyncadd [#allocation3], %s245
          %s247 = sshll.u32 [#allocation2], 4
          %s248 = int_to_ptr.vmem [resolvable:$true] %s247
          %253 = dma.hbm_to_vmem [thread:$0]  %s4, 256, %s248, [#allocation3], 64, 64, 4
        $region28: #{tpu_custom_call.1} parent=11 // pred_fallthru
          _
        // Predicated region
        $region29: #{tpu_custom_call.1} parent=11 // pred_check
          %p254 = pneg %p149
        $region30: #{tpu_custom_call.1} parent=11 // pred_check_branch
          %256 = sbr.rel (%p254) target = $region32
        $region31: #{tpu_custom_call.1} parent=11 // pred_region
          _
        $region32: #{tpu_custom_call.1} parent=11 // pred_fallthru
          _
        // Predicated region
        $region33: #{tpu_custom_call.1} parent=11 // pred_check
          %p257 = pneg %p170
        $region34: #{tpu_custom_call.1} parent=11 // pred_check_branch
          %259 = sbr.rel (%p257) target = $region36
        $region35: #{tpu_custom_call.1} parent=11 // pred_region
          _
        $region36: #{tpu_custom_call.1} parent=11 // pred_fallthru
          _
        // Predicated region
        $region37: #{tpu_custom_call.1} parent=11 // pred_check
          %p260 = pneg %p191
        $region38: #{tpu_custom_call.1} parent=11 // pred_check_branch
          %262 = sbr.rel (%p260) target = $region40
        $region39: #{tpu_custom_call.1} parent=11 // pred_region
          _
        $region40: #{tpu_custom_call.1} parent=11 // pred_fallthru
          _
      $region12: #{tpu_custom_call.1} parent=5 // pred_fallthru
        _
      %p263 = scmp.lt.s32.totalorder %s18, 2
      // Predicated region
      $region41: #{tpu_custom_call.1} parent=5 // pred_check
        %p264 = pneg %p263
      $region42: #{tpu_custom_call.1} parent=5 // pred_check_branch
        %266 = sbr.rel (%p264) target = $region44
      $region43: #{tpu_custom_call.1} parent=5 // pred_region
        // Predicated region
        $region45: #{tpu_custom_call.1} parent=43 // pred_check
          %p267 = pneg %p38
        $region46: #{tpu_custom_call.1} parent=43 // pred_check_branch
          %269 = sbr.rel (%p267) target = $region48
        $region47: #{tpu_custom_call.1} parent=43 // pred_region
          %p270 = scmp.lt.s32.totalorder %s18, 1
          %s271 = scalar_select %p270, %s18, 1
          %s272 = smul.addr %s271, 8
          %s273 = scalar_lea.vmem %s0, %s272
        $region48: #{tpu_custom_call.1} parent=43 // pred_fallthru
          _
      $region44: #{tpu_custom_call.1} parent=5 // pred_fallthru
        _
      %p274 = scmp.le.s32.totalorder 1, %s18
      %p275 = scmp.lt.s32.totalorder %s18, 3
      %p276 = pnand %p274, %p275
      %p277 = pneg %p276
      // Predicated region
      $region49: #{tpu_custom_call.1} parent=5 // pred_check
        _
      $region50: #{tpu_custom_call.1} parent=5 // pred_check_branch
        %279 = sbr.rel (%p276) target = $region52
      $region51: #{tpu_custom_call.1} parent=5 // pred_region
        %s280 = ssub.s32 %s18, 1
        // Predicated region
        $region53: #{tpu_custom_call.1} parent=51 // pred_check
          %p281 = pneg %p128
        $region54: #{tpu_custom_call.1} parent=51 // pred_check_branch
          %283 = sbr.rel (%p281) target = $region56
        $region55: #{tpu_custom_call.1} parent=51 // pred_region
          %284 = dma.done [#allocation3], 256
        $region56: #{tpu_custom_call.1} parent=51 // pred_fallthru
          _
        %p285 = scmp.lt.s32.totalorder %s23, 1
        %s286 = scalar_select %p285, %s23, 1
        %s287 = smul.addr %s286, 8
        %s288 = scalar_lea.vmem %s0, %s287
        %p289 = pneg %p44
        %p290 = pneg %p41
        %p291 = pneg %p65
        %p292 = pneg %p62
        %p293 = pneg %p86
        %p294 = pneg %p83
        %p295 = pneg %p107
        %p296 = pneg %p104
        %p297 = pneg %p128
        %p298 = pneg %p125
        %p299 = pneg %p149
        %p300 = pneg %p146
        %p301 = pneg %p170
        %p302 = pneg %p167
        %p303 = pneg %p191
        %p304 = pneg %p188
        %p305 = pneg %p217
        %p306 = pneg %p214
        %s307 = sand.u32 %s204, 1
        %s308 = scalar_lea.sflag [#allocation4], %s307
        %s309 = sand.u32 %s204, 1
        %s310 = smul.addr %s309, 8
        %s311 = scalar_lea.vmem [#allocation5], %s310
        %p312 = scmp.lt.s32.totalorder %s23, 1
        %s313 = scalar_select %p312, %s23, 1
        %s314 = smul.addr %s313, 8
        %s315 = scalar_lea.vmem %s0, %s314
        %v317 = vld [vmem:[%s315] sm:$0xff]
        %v318 = vpack.c.bf16 %v317, %v317
        %v319 = vld [vmem:[%s1] sm:$0xf]
        %v320 = vld [vmem:[%s1 + $0x4] sm:$0xf]
        %v321 = vld [vmem:[%s1 + $0x8] sm:$0xf]
        %v322 = vld [vmem:[%s1 + $0xc] sm:$0xf]
        %v323 = vld [vmem:[%s2] sm:$0x1]
        %v325 = vlaneseq
        %v326 = vshrl.u32 %v325, 7
        %v327 = vsub.s32 0, %v326
        %v328 = vrot.slane %v323, %v327
        %v334 = vunpack.c.l.b16 %v319
        %v335 = vunpack.c.l.b16 %v320
        %v336 = vunpack.c.l.b16 %v321
        %v337 = vunpack.c.l.b16 %v322
        %v338 = vpack.c.b16 %v335, %v334
        %v339 = vpack.c.b16 %v337, %v336
        %vm342 = vcmask 261120
        %v344 = vsel %vm342, %v318, 0
        %346 = vmatprep.subr.bf16.mxu0 0
        %347 = vmatpush1.bf16.msra.mxu0 %v338
        %348 = vmatprep.subr.bf16.mxu0 0
        %349 = vmatpush1.bf16.msra.mxu0 %v339
        %350 = vmatprep.subr.bf16.mxu0 0
        %351 = vmatpush1.bf16.msra.mxu0 0
        %352 = vmatprep.subr.bf16.mxu0 0
        %353 = vmatpush1.bf16.msra.mxu0 0
        %354 = vmatprep.subr.bf16.mxu0 0
        %355 = vmatpush1.bf16.msra.mxu0 0
        %356 = vmatprep.subr.bf16.mxu0 0
        %357 = vmatpush1.bf16.msra.mxu0 0
        %358 = vmatprep.subr.bf16.mxu0 0
        %359 = vmatpush1.bf16.msra.mxu0 0
        %360 = vmatprep.subr.bf16.mxu0 0
        %361 = vmatpush1.bf16.msra.mxu0 0
        %362 = vmatprep.subr.bf16.mxu0 0
        %363 = vmatpush1.bf16.msra.mxu0 0
        %364 = vmatprep.subr.bf16.mxu0 0
        %365 = vmatpush1.bf16.msra.mxu0 0
        %366 = vmatprep.subr.bf16.mxu0 0
        %367 = vmatpush1.bf16.msra.mxu0 0
        %368 = vmatprep.subr.bf16.mxu0 0
        %369 = vmatpush1.bf16.msra.mxu0 0
        %370 = vmatprep.subr.bf16.mxu0 0
        %371 = vmatpush1.bf16.msra.mxu0 0
        %372 = vmatprep.subr.bf16.mxu0 0
        %373 = vmatpush1.bf16.msra.mxu0 0
        %374 = vmatprep.subr.bf16.mxu0 0
        %375 = vmatpush1.bf16.msra.mxu0 0
        %376 = vmatprep.subr.bf16.mxu0 0
        %377 = vmatpush1.bf16.msra.mxu0 0
        %378 = vmatprep.mubr.bf16.mxu0 0
        %379 = vmatmul.mubr.bf16.gmra.mrb[0].mxu0 %v344
        %v380 = vpop.f32.mrb[0].mxu0
        %v381 = vadd.f32 %v328, %v380
        %v382 = vpop.f32.mrb[0].mxu0
        %v383 = vpop.f32.mrb[0].mxu0
        %v384 = vpop.f32.mrb[0].mxu0
        %385 = vdwg.mxu0
        %v386 = vpack.c.bf16 %v381, %v381
        %388 = vrot.lane.b32.xlu0 %v386, 120
        %v389 = vpop.permute.xlu0 %388
        %390 = vrot.lane.b32.xlu0 %v386, 112
        %v391 = vpop.permute.xlu0 %390
        %392 = vrot.lane.b32.xlu0 %v386, 104
        %v393 = vpop.permute.xlu0 %392
        %v395 = vunpack.c.l.s4 1983009808
        %v396 = vunpack.c.0.s8 %v395
        %v397 = vlaneseq
        %v398 = vshrl.u32 %v397, 7
        %v399 = vsub.s32 %v396, %v398
        %v400 = vrot.slane %v386, %v399
        %v403 = vunpack.c.l.s4 1983009808
        %v404 = vunpack.c.0.s8 %v403
        %v405 = vlaneseq
        %v406 = vshrl.u32 %v405, 7
        %v407 = vsub.s32 %v404, %v406
        %v408 = vrot.slane %v391, %v407
        %v409 = vcombine.low %v400, %v408
        %v410 = vcombine.high %v400, %v408
        %v412 = vunpack.c.l.s4 1934713408
        %v413 = vunpack.c.0.s8 %v412
        %v414 = vlaneseq
        %v415 = vshrl.u32 %v414, 7
        %v416 = vsub.s32 %v413, %v415
        %v417 = vrot.slane %v409, %v416
        %v419 = vunpack.c.l.s4 1934713408
        %v420 = vunpack.c.0.s8 %v419
        %v421 = vlaneseq
        %v422 = vshrl.u32 %v421, 7
        %v423 = vsub.s32 %v420, %v422
        %v424 = vrot.slane %v410, %v423
        %v425 = vcombine.high %v417, 0
        %v426 = vcombine.high %v424, 0
        %v429 = vunpack.c.l.s4 1983009808
        %v430 = vunpack.c.0.s8 %v429
        %v431 = vlaneseq
        %v432 = vshrl.u32 %v431, 7
        %v433 = vsub.s32 %v430, %v432
        %v434 = vrot.slane %v389, %v433
        %v437 = vunpack.c.l.s4 1983009808
        %v438 = vunpack.c.0.s8 %v437
        %v439 = vlaneseq
        %v440 = vshrl.u32 %v439, 7
        %v441 = vsub.s32 %v438, %v440
        %v442 = vrot.slane %v393, %v441
        %v443 = vcombine.low %v434, %v442
        %v444 = vcombine.high %v434, %v442
        %v446 = vunpack.c.l.s4 1934713408
        %v447 = vunpack.c.0.s8 %v446
        %v448 = vlaneseq
        %v449 = vshrl.u32 %v448, 7
        %v450 = vsub.s32 %v447, %v449
        %v451 = vrot.slane %v443, %v450
        %v453 = vunpack.c.l.s4 1934713408
        %v454 = vunpack.c.0.s8 %v453
        %v455 = vlaneseq
        %v456 = vshrl.u32 %v455, 7
        %v457 = vsub.s32 %v454, %v456
        %v458 = vrot.slane %v444, %v457
        %v459 = vcombine.high %v451, 0
        %v460 = vcombine.high %v458, 0
        %v463 = vpack.i.b16 %v451, %v417
        %v465 = vshrl.u32 %v417, 16
        %v466 = vshrl.u32 %v451, 16
        %v467 = vpack.i.b16 %v466, %v465
        %v471 = vpack.i.b16 %v459, %v425
        %v473 = vshrl.u32 %v425, 16
        %v474 = vshrl.u32 %v459, 16
        %v475 = vpack.i.b16 %v474, %v473
        %v479 = vpack.i.b16 %v458, %v424
        %v481 = vshrl.u32 %v424, 16
        %v482 = vshrl.u32 %v458, 16
        %v483 = vpack.i.b16 %v482, %v481
        %v487 = vpack.i.b16 %v460, %v426
        %v489 = vshrl.u32 %v426, 16
        %v490 = vshrl.u32 %v460, 16
        %v491 = vpack.i.b16 %v490, %v489
        %v493 = vcombine.low %v463, %v479
        %v495 = vunpack.c.l.s4 1983009808
        %v496 = vunpack.c.0.s8 %v495
        %v497 = vlaneseq
        %v498 = vshrl.u32 %v497, 7
        %v499 = vsub.s32 %v496, %v498
        %v500 = vrot.slane %v493, %v499
        %v501 = vcombine.low %v471, %v487
        %v503 = vunpack.c.l.s4 1983009808
        %v504 = vunpack.c.0.s8 %v503
        %v505 = vlaneseq
        %v506 = vshrl.u32 %v505, 7
        %v507 = vsub.s32 %v504, %v506
        %v508 = vrot.slane %v501, %v507
        %v509 = vcombine.low %v500, %v508
        %v511 = vunpack.c.l.s4 1934713408
        %v512 = vunpack.c.0.s8 %v511
        %v513 = vlaneseq
        %v514 = vshrl.u32 %v513, 7
        %v515 = vsub.s32 %v512, %v514
        %v516 = vrot.slane %v509, %v515
        %v517 = vcombine.high %v516, 0
        %v518 = vcombine.low %v467, %v483
        %v520 = vunpack.c.l.s4 1983009808
        %v521 = vunpack.c.0.s8 %v520
        %v522 = vlaneseq
        %v523 = vshrl.u32 %v522, 7
        %v524 = vsub.s32 %v521, %v523
        %v525 = vrot.slane %v518, %v524
        %v526 = vcombine.low %v475, %v491
        %v528 = vunpack.c.l.s4 1983009808
        %v529 = vunpack.c.0.s8 %v528
        %v530 = vlaneseq
        %v531 = vshrl.u32 %v530, 7
        %v532 = vsub.s32 %v529, %v531
        %v533 = vrot.slane %v526, %v532
        %v534 = vcombine.low %v525, %v533
        %v536 = vunpack.c.l.s4 1934713408
        %v537 = vunpack.c.0.s8 %v536
        %v538 = vlaneseq
        %v539 = vshrl.u32 %v538, 7
        %v540 = vsub.s32 %v537, %v539
        %v541 = vrot.slane %v534, %v540
        %v542 = vcombine.high %v541, 0
        %v545 = vpack.i.b16 %v541, %v516
        %v546 = vshrl.u32 %v516, 16
        %v547 = vshrl.u32 %v541, 16
        %v548 = vpack.i.b16 %v547, %v546
        %v551 = vpack.i.b16 %v542, %v517
        %v552 = vshrl.u32 %v517, 16
        %v553 = vshrl.u32 %v542, 16
        %v554 = vpack.i.b16 %v553, %v552
        %555 = vrot.lane.b32.xlu0 %v386, 96
        %v556 = vpop.permute.xlu0 %555
        %557 = vrot.lane.b32.xlu0 %v389, 96
        %v558 = vpop.permute.xlu0 %557
        %559 = vrot.lane.b32.xlu0 %v391, 96
        %v560 = vpop.permute.xlu0 %559
        %561 = vrot.lane.b32.xlu0 %v393, 96
        %v562 = vpop.permute.xlu0 %561
        %v565 = vunpack.c.l.s4 1983009808
        %v566 = vunpack.c.0.s8 %v565
        %v567 = vlaneseq
        %v568 = vshrl.u32 %v567, 7
        %v569 = vsub.s32 %v566, %v568
        %v570 = vrot.slane %v556, %v569
        %v573 = vunpack.c.l.s4 1983009808
        %v574 = vunpack.c.0.s8 %v573
        %v575 = vlaneseq
        %v576 = vshrl.u32 %v575, 7
        %v577 = vsub.s32 %v574, %v576
        %v578 = vrot.slane %v560, %v577
        %v579 = vcombine.low %v570, %v578
        %v580 = vcombine.high %v570, %v578
        %v582 = vunpack.c.l.s4 1934713408
        %v583 = vunpack.c.0.s8 %v582
        %v584 = vlaneseq
        %v585 = vshrl.u32 %v584, 7
        %v586 = vsub.s32 %v583, %v585
        %v587 = vrot.slane %v579, %v586
        %v589 = vunpack.c.l.s4 1934713408
        %v590 = vunpack.c.0.s8 %v589
        %v591 = vlaneseq
        %v592 = vshrl.u32 %v591, 7
        %v593 = vsub.s32 %v590, %v592
        %v594 = vrot.slane %v580, %v593
        %v595 = vcombine.high %v587, 0
        %v596 = vcombine.high %v594, 0
        %v599 = vunpack.c.l.s4 1983009808
        %v600 = vunpack.c.0.s8 %v599
        %v601 = vlaneseq
        %v602 = vshrl.u32 %v601, 7
        %v603 = vsub.s32 %v600, %v602
        %v604 = vrot.slane %v558, %v603
        %v607 = vunpack.c.l.s4 1983009808
        %v608 = vunpack.c.0.s8 %v607
        %v609 = vlaneseq
        %v610 = vshrl.u32 %v609, 7
        %v611 = vsub.s32 %v608, %v610
        %v612 = vrot.slane %v562, %v611
        %v613 = vcombine.low %v604, %v612
        %v614 = vcombine.high %v604, %v612
        %v616 = vunpack.c.l.s4 1934713408
        %v617 = vunpack.c.0.s8 %v616
        %v618 = vlaneseq
        %v619 = vshrl.u32 %v618, 7
        %v620 = vsub.s32 %v617, %v619
        %v621 = vrot.slane %v613, %v620
        %v623 = vunpack.c.l.s4 1934713408
        %v624 = vunpack.c.0.s8 %v623
        %v625 = vlaneseq
        %v626 = vshrl.u32 %v625, 7
        %v627 = vsub.s32 %v624, %v626
        %v628 = vrot.slane %v614, %v627
        %v629 = vcombine.high %v621, 0
        %v630 = vcombine.high %v628, 0
        %v633 = vpack.i.b16 %v621, %v587
        %v635 = vshrl.u32 %v587, 16
        %v636 = vshrl.u32 %v621, 16
        %v637 = vpack.i.b16 %v636, %v635
        %v641 = vpack.i.b16 %v629, %v595
        %v643 = vshrl.u32 %v595, 16
        %v644 = vshrl.u32 %v629, 16
        %v645 = vpack.i.b16 %v644, %v643
        %v649 = vpack.i.b16 %v628, %v594
        %v651 = vshrl.u32 %v594, 16
        %v652 = vshrl.u32 %v628, 16
        %v653 = vpack.i.b16 %v652, %v651
        %v657 = vpack.i.b16 %v630, %v596
        %v659 = vshrl.u32 %v596, 16
        %v660 = vshrl.u32 %v630, 16
        %v661 = vpack.i.b16 %v660, %v659
        %v663 = vcombine.low %v633, %v649
        %v665 = vunpack.c.l.s4 1983009808
        %v666 = vunpack.c.0.s8 %v665
        %v667 = vlaneseq
        %v668 = vshrl.u32 %v667, 7
        %v669 = vsub.s32 %v666, %v668
        %v670 = vrot.slane %v663, %v669
        %v671 = vcombine.low %v641, %v657
        %v673 = vunpack.c.l.s4 1983009808
        %v674 = vunpack.c.0.s8 %v673
        %v675 = vlaneseq
        %v676 = vshrl.u32 %v675, 7
        %v677 = vsub.s32 %v674, %v676
        %v678 = vrot.slane %v671, %v677
        %v679 = vcombine.low %v670, %v678
        %v681 = vunpack.c.l.s4 1934713408
        %v682 = vunpack.c.0.s8 %v681
        %v683 = vlaneseq
        %v684 = vshrl.u32 %v683, 7
        %v685 = vsub.s32 %v682, %v684
        %v686 = vrot.slane %v679, %v685
        %v687 = vcombine.high %v686, 0
        %v688 = vcombine.low %v637, %v653
        %v690 = vunpack.c.l.s4 1983009808
        %v691 = vunpack.c.0.s8 %v690
        %v692 = vlaneseq
        %v693 = vshrl.u32 %v692, 7
        %v694 = vsub.s32 %v691, %v693
        %v695 = vrot.slane %v688, %v694
        %v696 = vcombine.low %v645, %v661
        %v698 = vunpack.c.l.s4 1983009808
        %v699 = vunpack.c.0.s8 %v698
        %v700 = vlaneseq
        %v701 = vshrl.u32 %v700, 7
        %v702 = vsub.s32 %v699, %v701
        %v703 = vrot.slane %v696, %v702
        %v704 = vcombine.low %v695, %v703
        %v706 = vunpack.c.l.s4 1934713408
        %v707 = vunpack.c.0.s8 %v706
        %v708 = vlaneseq
        %v709 = vshrl.u32 %v708, 7
        %v710 = vsub.s32 %v707, %v709
        %v711 = vrot.slane %v704, %v710
        %v712 = vcombine.high %v711, 0
        %v715 = vpack.i.b16 %v711, %v686
        %v716 = vshrl.u32 %v686, 16
        %v717 = vshrl.u32 %v711, 16
        %v718 = vpack.i.b16 %v717, %v716
        %v721 = vpack.i.b16 %v712, %v687
        %v722 = vshrl.u32 %v687, 16
        %v723 = vshrl.u32 %v712, 16
        %v724 = vpack.i.b16 %v723, %v722
        %725 = vrot.lane.b32.xlu0 %v386, 64
        %v726 = vpop.permute.xlu0 %725
        %727 = vrot.lane.b32.xlu0 %v389, 64
        %v728 = vpop.permute.xlu0 %727
        %729 = vrot.lane.b32.xlu0 %v391, 64
        %v730 = vpop.permute.xlu0 %729
        %731 = vrot.lane.b32.xlu0 %v393, 64
        %v732 = vpop.permute.xlu0 %731
        %v735 = vunpack.c.l.s4 1983009808
        %v736 = vunpack.c.0.s8 %v735
        %v737 = vlaneseq
        %v738 = vshrl.u32 %v737, 7
        %v739 = vsub.s32 %v736, %v738
        %v740 = vrot.slane %v726, %v739
        %v743 = vunpack.c.l.s4 1983009808
        %v744 = vunpack.c.0.s8 %v743
        %v745 = vlaneseq
        %v746 = vshrl.u32 %v745, 7
        %v747 = vsub.s32 %v744, %v746
        %v748 = vrot.slane %v730, %v747
        %v749 = vcombine.low %v740, %v748
        %v750 = vcombine.high %v740, %v748
        %v752 = vunpack.c.l.s4 1934713408
        %v753 = vunpack.c.0.s8 %v752
        %v754 = vlaneseq
        %v755 = vshrl.u32 %v754, 7
        %v756 = vsub.s32 %v753, %v755
        %v757 = vrot.slane %v749, %v756
        %v759 = vunpack.c.l.s4 1934713408
        %v760 = vunpack.c.0.s8 %v759
        %v761 = vlaneseq
        %v762 = vshrl.u32 %v761, 7
        %v763 = vsub.s32 %v760, %v762
        %v764 = vrot.slane %v750, %v763
        %v765 = vcombine.high %v757, 0
        %v766 = vcombine.high %v764, 0
        %v769 = vunpack.c.l.s4 1983009808
        %v770 = vunpack.c.0.s8 %v769
        %v771 = vlaneseq
        %v772 = vshrl.u32 %v771, 7
        %v773 = vsub.s32 %v770, %v772
        %v774 = vrot.slane %v728, %v773
        %v777 = vunpack.c.l.s4 1983009808
        %v778 = vunpack.c.0.s8 %v777
        %v779 = vlaneseq
        %v780 = vshrl.u32 %v779, 7
        %v781 = vsub.s32 %v778, %v780
        %v782 = vrot.slane %v732, %v781
        %v783 = vcombine.low %v774, %v782
        %v784 = vcombine.high %v774, %v782
        %v786 = vunpack.c.l.s4 1934713408
        %v787 = vunpack.c.0.s8 %v786
        %v788 = vlaneseq
        %v789 = vshrl.u32 %v788, 7
        %v790 = vsub.s32 %v787, %v789
        %v791 = vrot.slane %v783, %v790
        %v793 = vunpack.c.l.s4 1934713408
        %v794 = vunpack.c.0.s8 %v793
        %v795 = vlaneseq
        %v796 = vshrl.u32 %v795, 7
        %v797 = vsub.s32 %v794, %v796
        %v798 = vrot.slane %v784, %v797
        %v799 = vcombine.high %v791, 0
        %v800 = vcombine.high %v798, 0
        %v803 = vpack.i.b16 %v791, %v757
        %v805 = vshrl.u32 %v757, 16
        %v806 = vshrl.u32 %v791, 16
        %v807 = vpack.i.b16 %v806, %v805
        %v811 = vpack.i.b16 %v799, %v765
        %v813 = vshrl.u32 %v765, 16
        %v814 = vshrl.u32 %v799, 16
        %v815 = vpack.i.b16 %v814, %v813
        %v819 = vpack.i.b16 %v798, %v764
        %v821 = vshrl.u32 %v764, 16
        %v822 = vshrl.u32 %v798, 16
        %v823 = vpack.i.b16 %v822, %v821
        %v827 = vpack.i.b16 %v800, %v766
        %v829 = vshrl.u32 %v766, 16
        %v830 = vshrl.u32 %v800, 16
        %v831 = vpack.i.b16 %v830, %v829
        %v833 = vcombine.low %v803, %v819
        %v835 = vunpack.c.l.s4 1983009808
        %v836 = vunpack.c.0.s8 %v835
        %v837 = vlaneseq
        %v838 = vshrl.u32 %v837, 7
        %v839 = vsub.s32 %v836, %v838
        %v840 = vrot.slane %v833, %v839
        %v841 = vcombine.low %v811, %v827
        %v843 = vunpack.c.l.s4 1983009808
        %v844 = vunpack.c.0.s8 %v843
        %v845 = vlaneseq
        %v846 = vshrl.u32 %v845, 7
        %v847 = vsub.s32 %v844, %v846
        %v848 = vrot.slane %v841, %v847
        %v849 = vcombine.low %v840, %v848
        %v851 = vunpack.c.l.s4 1934713408
        %v852 = vunpack.c.0.s8 %v851
        %v853 = vlaneseq
        %v854 = vshrl.u32 %v853, 7
        %v855 = vsub.s32 %v852, %v854
        %v856 = vrot.slane %v849, %v855
        %v857 = vcombine.high %v856, 0
        %v858 = vcombine.low %v807, %v823
        %v860 = vunpack.c.l.s4 1983009808
        %v861 = vunpack.c.0.s8 %v860
        %v862 = vlaneseq
        %v863 = vshrl.u32 %v862, 7
        %v864 = vsub.s32 %v861, %v863
        %v865 = vrot.slane %v858, %v864
        %v866 = vcombine.low %v815, %v831
        %v868 = vunpack.c.l.s4 1983009808
        %v869 = vunpack.c.0.s8 %v868
        %v870 = vlaneseq
        %v871 = vshrl.u32 %v870, 7
        %v872 = vsub.s32 %v869, %v871
        %v873 = vrot.slane %v866, %v872
        %v874 = vcombine.low %v865, %v873
        %v876 = vunpack.c.l.s4 1934713408
        %v877 = vunpack.c.0.s8 %v876
        %v878 = vlaneseq
        %v879 = vshrl.u32 %v878, 7
        %v880 = vsub.s32 %v877, %v879
        %v881 = vrot.slane %v874, %v880
        %v882 = vcombine.high %v881, 0
        %v885 = vpack.i.b16 %v881, %v856
        %v886 = vshrl.u32 %v856, 16
        %v887 = vshrl.u32 %v881, 16
        %v888 = vpack.i.b16 %v887, %v886
        %v891 = vpack.i.b16 %v882, %v857
        %v892 = vshrl.u32 %v857, 16
        %v893 = vshrl.u32 %v882, 16
        %v894 = vpack.i.b16 %v893, %v892
        %vm895 = vcmask 64512
        %v897 = vsel %vm895, %v545, 0
        %v900 = vsel %vm895, %v715, 0
        %902 = vmatprep.subr.bf16.mxu0 0
        %903 = vmatpush1.bf16.xpose.msra.mxu0 %v900
        %904 = vmatprep.subr.bf16.mxu0 0
        %905 = vmatpush1.bf16.xpose.msra.mxu0 0
        %906 = vmatprep.subr.bf16.mxu0 0
        %907 = vmatpush1.bf16.xpose.msra.mxu0 0
        %908 = vmatprep.subr.bf16.mxu0 0
        %909 = vmatpush1.bf16.xpose.msra.mxu0 0
        %910 = vmatprep.subr.bf16.mxu0 0
        %911 = vmatpush1.bf16.xpose.msra.mxu0 0
        %912 = vmatprep.subr.bf16.mxu0 0
        %913 = vmatpush1.bf16.xpose.msra.mxu0 0
        %914 = vmatprep.subr.bf16.mxu0 0
        %915 = vmatpush1.bf16.xpose.msra.mxu0 0
        %916 = vmatprep.subr.bf16.mxu0 0
        %917 = vmatpush1.bf16.xpose.msra.mxu0 0
        %918 = vmatprep.subr.bf16.mxu0 0
        %919 = vmatpush1.bf16.xpose.msra.mxu0 0
        %920 = vmatprep.subr.bf16.mxu0 0
        %921 = vmatpush1.bf16.xpose.msra.mxu0 0
        %922 = vmatprep.subr.bf16.mxu0 0
        %923 = vmatpush1.bf16.xpose.msra.mxu0 0
        %924 = vmatprep.subr.bf16.mxu0 0
        %925 = vmatpush1.bf16.xpose.msra.mxu0 0
        %926 = vmatprep.subr.bf16.mxu0 0
        %927 = vmatpush1.bf16.xpose.msra.mxu0 0
        %928 = vmatprep.subr.bf16.mxu0 0
        %929 = vmatpush1.bf16.xpose.msra.mxu0 0
        %930 = vmatprep.subr.bf16.mxu0 0
        %931 = vmatpush1.bf16.xpose.msra.mxu0 0
        %932 = vmatprep.subr.bf16.mxu0 0
        %933 = vmatpush1.bf16.xpose.msra.mxu0 0
        %934 = vmatprep.mubr.bf16.mxu0 0
        %935 = vmatmul.mubr.bf16.gmra.mrb[0].mxu0 %v897
        %v936 = vpop.f32.mrb[0].mxu0
        %v937 = vadd.f32 0.0, %v936
        %v938 = vpop.f32.mrb[0].mxu0
        %v939 = vpop.f32.mrb[0].mxu0
        %v940 = vpop.f32.mrb[0].mxu0
        %941 = vdwg.mxu0
        %v943 = vsel %vm895, %v548, 0
        %v946 = vsel %vm895, %v718, 0
        %948 = vmatprep.subr.bf16.mxu0 0
        %949 = vmatpush1.bf16.xpose.msra.mxu0 %v946
        %950 = vmatprep.subr.bf16.mxu0 0
        %951 = vmatpush1.bf16.xpose.msra.mxu0 0
        %952 = vmatprep.subr.bf16.mxu0 0
        %953 = vmatpush1.bf16.xpose.msra.mxu0 0
        %954 = vmatprep.subr.bf16.mxu0 0
        %955 = vmatpush1.bf16.xpose.msra.mxu0 0
        %956 = vmatprep.subr.bf16.mxu0 0
        %957 = vmatpush1.bf16.xpose.msra.mxu0 0
        %958 = vmatprep.subr.bf16.mxu0 0
        %959 = vmatpush1.bf16.xpose.msra.mxu0 0
        %960 = vmatprep.subr.bf16.mxu0 0
        %961 = vmatpush1.bf16.xpose.msra.mxu0 0
        %962 = vmatprep.subr.bf16.mxu0 0
        %963 = vmatpush1.bf16.xpose.msra.mxu0 0
        %964 = vmatprep.subr.bf16.mxu0 0
        %965 = vmatpush1.bf16.xpose.msra.mxu0 0
        %966 = vmatprep.subr.bf16.mxu0 0
        %967 = vmatpush1.bf16.xpose.msra.mxu0 0
        %968 = vmatprep.subr.bf16.mxu0 0
        %969 = vmatpush1.bf16.xpose.msra.mxu0 0
        %970 = vmatprep.subr.bf16.mxu0 0
        %971 = vmatpush1.bf16.xpose.msra.mxu0 0
        %972 = vmatprep.subr.bf16.mxu0 0
        %973 = vmatpush1.bf16.xpose.msra.mxu0 0
        %974 = vmatprep.subr.bf16.mxu0 0
        %975 = vmatpush1.bf16.xpose.msra.mxu0 0
        %976 = vmatprep.subr.bf16.mxu0 0
        %977 = vmatpush1.bf16.xpose.msra.mxu0 0
        %978 = vmatprep.subr.bf16.mxu0 0
        %979 = vmatpush1.bf16.xpose.msra.mxu0 0
        %980 = vmatprep.mubr.bf16.mxu0 0
        %981 = vmatmul.mubr.bf16.gmra.mrb[0].mxu0 %v943
        %v982 = vpop.f32.mrb[0].mxu0
        %v983 = vadd.f32 0.0, %v982
        %v984 = vpop.f32.mrb[0].mxu0
        %v985 = vpop.f32.mrb[0].mxu0
        %v986 = vpop.f32.mrb[0].mxu0
        %987 = vdwg.mxu0
        %v989 = vsel %vm895, %v551, 0
        %v992 = vsel %vm895, %v721, 0
        %994 = vmatprep.subr.bf16.mxu0 0
        %995 = vmatpush1.bf16.xpose.msra.mxu0 %v992
        %996 = vmatprep.subr.bf16.mxu0 0
        %997 = vmatpush1.bf16.xpose.msra.mxu0 0
        %998 = vmatprep.subr.bf16.mxu0 0
        %999 = vmatpush1.bf16.xpose.msra.mxu0 0
        %1000 = vmatprep.subr.bf16.mxu0 0
        %1001 = vmatpush1.bf16.xpose.msra.mxu0 0
        %1002 = vmatprep.subr.bf16.mxu0 0
        %1003 = vmatpush1.bf16.xpose.msra.mxu0 0
        %1004 = vmatprep.subr.bf16.mxu0 0
        %1005 = vmatpush1.bf16.xpose.msra.mxu0 0
        %1006 = vmatprep.subr.bf16.mxu0 0
        %1007 = vmatpush1.bf16.xpose.msra.mxu0 0
        %1008 = vmatprep.subr.bf16.mxu0 0
        %1009 = vmatpush1.bf16.xpose.msra.mxu0 0
        %1010 = vmatprep.subr.bf16.mxu0 0
        %1011 = vmatpush1.bf16.xpose.msra.mxu0 0
        %1012 = vmatprep.subr.bf16.mxu0 0
        %1013 = vmatpush1.bf16.xpose.msra.mxu0 0
        %1014 = vmatprep.subr.bf16.mxu0 0
        %1015 = vmatpush1.bf16.xpose.msra.mxu0 0
        %1016 = vmatprep.subr.bf16.mxu0 0
        %1017 = vmatpush1.bf16.xpose.msra.mxu0 0
        %1018 = vmatprep.subr.bf16.mxu0 0
        %1019 = vmatpush1.bf16.xpose.msra.mxu0 0
        %1020 = vmatprep.subr.bf16.mxu0 0
        %1021 = vmatpush1.bf16.xpose.msra.mxu0 0
        %1022 = vmatprep.subr.bf16.mxu0 0
        %1023 = vmatpush1.bf16.xpose.msra.mxu0 0
        %1024 = vmatprep.subr.bf16.mxu0 0
        %1025 = vmatpush1.bf16.xpose.msra.mxu0 0
        %1026 = vmatprep.mubr.bf16.mxu0 0
        %1027 = vmatmul.mubr.bf16.gmra.mrb[0].mxu0 %v989
        %v1028 = vpop.f32.mrb[0].mxu0
        %v1029 = vadd.f32 0.0, %v1028
        %v1030 = vpop.f32.mrb[0].mxu0
        %v1031 = vpop.f32.mrb[0].mxu0
        %v1032 = vpop.f32.mrb[0].mxu0
        %1033 = vdwg.mxu0
        %v1035 = vsel %vm895, %v554, 0
        %v1038 = vsel %vm895, %v724, 0
        %1040 = vmatprep.subr.bf16.mxu0 0
        %1041 = vmatpush1.bf16.xpose.msra.mxu0 %v1038
        %1042 = vmatprep.subr.bf16.mxu0 0
        %1043 = vmatpush1.bf16.xpose.msra.mxu0 0
        %1044 = vmatprep.subr.bf16.mxu0 0
        %1045 = vmatpush1.bf16.xpose.msra.mxu0 0
        %1046 = vmatprep.subr.bf16.mxu0 0
        %1047 = vmatpush1.bf16.xpose.msra.mxu0 0
        %1048 = vmatprep.subr.bf16.mxu0 0
        %1049 = vmatpush1.bf16.xpose.msra.mxu0 0
        %1050 = vmatprep.subr.bf16.mxu0 0
        %1051 = vmatpush1.bf16.xpose.msra.mxu0 0
        %1052 = vmatprep.subr.bf16.mxu0 0
        %1053 = vmatpush1.bf16.xpose.msra.mxu0 0
        %1054 = vmatprep.subr.bf16.mxu0 0
        %1055 = vmatpush1.bf16.xpose.msra.mxu0 0
        %1056 = vmatprep.subr.bf16.mxu0 0
        %1057 = vmatpush1.bf16.xpose.msra.mxu0 0
        %1058 = vmatprep.subr.bf16.mxu0 0
        %1059 = vmatpush1.bf16.xpose.msra.mxu0 0
        %1060 = vmatprep.subr.bf16.mxu0 0
        %1061 = vmatpush1.bf16.xpose.msra.mxu0 0
        %1062 = vmatprep.subr.bf16.mxu0 0
        %1063 = vmatpush1.bf16.xpose.msra.mxu0 0
        %1064 = vmatprep.subr.bf16.mxu0 0
        %1065 = vmatpush1.bf16.xpose.msra.mxu0 0
        %1066 = vmatprep.subr.bf16.mxu0 0
        %1067 = vmatpush1.bf16.xpose.msra.mxu0 0
        %1068 = vmatprep.subr.bf16.mxu0 0
        %1069 = vmatpush1.bf16.xpose.msra.mxu0 0
        %1070 = vmatprep.subr.bf16.mxu0 0
        %1071 = vmatpush1.bf16.xpose.msra.mxu0 0
        %1072 = vmatprep.mubr.bf16.mxu0 0
        %1073 = vmatmul.mubr.bf16.gmra.mrb[0].mxu0 %v1035
        %v1074 = vpop.f32.mrb[0].mxu0
        %v1075 = vadd.f32 0.0, %v1074
        %v1076 = vpop.f32.mrb[0].mxu0
        %v1077 = vpop.f32.mrb[0].mxu0
        %v1078 = vpop.f32.mrb[0].mxu0
        %1079 = vdwg.mxu0
        %v1080 = vsel %vm895, %v937, -inf
        %1081 = vmax.xlane.f32.xlu0 %v1080
        %v1082 = vpop.xlane.xlu0 %1081
        %v1083 = vsel %vm895, %v983, -inf
        %1084 = vmax.xlane.f32.xlu0 %v1083
        %v1085 = vpop.xlane.xlu0 %1084
        %v1086 = vsel %vm895, %v1029, -inf
        %1087 = vmax.xlane.f32.xlu0 %v1086
        %v1088 = vpop.xlane.xlu0 %1087
        %v1089 = vsel %vm895, %v1075, -inf
        %1090 = vmax.xlane.f32.xlu0 %v1089
        %v1091 = vpop.xlane.xlu0 %1090
        %v1092 = vsub.f32 %v937, %v1082
        %v1093 = vsub.f32 %v983, %v1085
        %v1094 = vsub.f32 %v1029, %v1088
        %v1095 = vsub.f32 %v1075, %v1091
        %v1096 = vmul.f32 %v1092, 1.442695
        %v1097 = vpow.pop %v1096
        %v1098 = vmul.f32 %v1093, 1.442695
        %v1099 = vpow.pop %v1098
        %v1100 = vmul.f32 %v1094, 1.442695
        %v1101 = vpow.pop %v1100
        %v1102 = vmul.f32 %v1095, 1.442695
        %v1103 = vpow.pop %v1102
        %v1104 = vsel %vm895, %v1097, 0.0
        %1105 = vadd.xlane.f32.xlu0 %v1104
        %v1106 = vpop.xlane.xlu0 %1105
        %v1107 = vsel %vm895, %v1099, 0.0
        %1108 = vadd.xlane.f32.xlu0 %v1107
        %v1109 = vpop.xlane.xlu0 %1108
        %v1110 = vsel %vm895, %v1101, 0.0
        %1111 = vadd.xlane.f32.xlu0 %v1110
        %v1112 = vpop.xlane.xlu0 %1111
        %v1113 = vsel %vm895, %v1103, 0.0
        %1114 = vadd.xlane.f32.xlu0 %v1113
        %v1115 = vpop.xlane.xlu0 %1114
        %v1116 = vrcp.pop %v1106
        %v1117 = vrcp.pop %v1109
        %v1118 = vrcp.pop %v1112
        %v1119 = vrcp.pop %v1115
        %v1120 = vmul.f32 %v1097, %v1116
        %v1121 = vmul.f32 %v1099, %v1117
        %v1122 = vmul.f32 %v1101, %v1118
        %v1123 = vmul.f32 %v1103, %v1119
        %v1124 = vpack.c.bf16 %v1120, %v1120
        %v1125 = vpack.c.bf16 %v1121, %v1121
        %v1126 = vpack.c.bf16 %v1122, %v1122
        %v1127 = vpack.c.bf16 %v1123, %v1123
        %v1129 = vsel %vm895, %v1124, 0
        %vm1131 = vcmask 1043456
        %v1133 = vsel %vm1131, %v885, 0
        %1135 = vmatprep.subr.bf16.mxu0 0
        %1136 = vmatpush1.bf16.msra.mxu0 %v1133
        %1137 = vmatprep.subr.bf16.mxu0 0
        %1138 = vmatpush1.bf16.msra.mxu0 0
        %1139 = vmatprep.subr.bf16.mxu0 0
        %1140 = vmatpush1.bf16.msra.mxu0 0
        %1141 = vmatprep.subr.bf16.mxu0 0
        %1142 = vmatpush1.bf16.msra.mxu0 0
        %1143 = vmatprep.subr.bf16.mxu0 0
        %1144 = vmatpush1.bf16.msra.mxu0 0
        %1145 = vmatprep.subr.bf16.mxu0 0
        %1146 = vmatpush1.bf16.msra.mxu0 0
        %1147 = vmatprep.subr.bf16.mxu0 0
        %1148 = vmatpush1.bf16.msra.mxu0 0
        %1149 = vmatprep.subr.bf16.mxu0 0
        %1150 = vmatpush1.bf16.msra.mxu0 0
        %1151 = vmatprep.subr.bf16.mxu0 0
        %1152 = vmatpush1.bf16.msra.mxu0 0
        %1153 = vmatprep.subr.bf16.mxu0 0
        %1154 = vmatpush1.bf16.msra.mxu0 0
        %1155 = vmatprep.subr.bf16.mxu0 0
        %1156 = vmatpush1.bf16.msra.mxu0 0
        %1157 = vmatprep.subr.bf16.mxu0 0
        %1158 = vmatpush1.bf16.msra.mxu0 0
        %1159 = vmatprep.subr.bf16.mxu0 0
        %1160 = vmatpush1.bf16.msra.mxu0 0
        %1161 = vmatprep.subr.bf16.mxu0 0
        %1162 = vmatpush1.bf16.msra.mxu0 0
        %1163 = vmatprep.subr.bf16.mxu0 0
        %1164 = vmatpush1.bf16.msra.mxu0 0
        %1165 = vmatprep.subr.bf16.mxu0 0
        %1166 = vmatpush1.bf16.msra.mxu0 0
        %1167 = vmatprep.mubr.bf16.mxu0 0
        %1168 = vmatmul.mubr.bf16.gmra.mrb[0].mxu0 %v1129
        %v1169 = vpop.f32.mrb[0].mxu0
        %v1170 = vadd.f32 0.0, %v1169
        %v1171 = vpop.f32.mrb[0].mxu0
        %v1172 = vpop.f32.mrb[0].mxu0
        %v1173 = vpop.f32.mrb[0].mxu0
        %1174 = vdwg.mxu0
        %v1176 = vsel %vm895, %v1125, 0
        %v1179 = vsel %vm1131, %v888, 0
        %1181 = vmatprep.subr.bf16.mxu0 0
        %1182 = vmatpush1.bf16.msra.mxu0 %v1179
        %1183 = vmatprep.subr.bf16.mxu0 0
        %1184 = vmatpush1.bf16.msra.mxu0 0
        %1185 = vmatprep.subr.bf16.mxu0 0
        %1186 = vmatpush1.bf16.msra.mxu0 0
        %1187 = vmatprep.subr.bf16.mxu0 0
        %1188 = vmatpush1.bf16.msra.mxu0 0
        %1189 = vmatprep.subr.bf16.mxu0 0
        %1190 = vmatpush1.bf16.msra.mxu0 0
        %1191 = vmatprep.subr.bf16.mxu0 0
        %1192 = vmatpush1.bf16.msra.mxu0 0
        %1193 = vmatprep.subr.bf16.mxu0 0
        %1194 = vmatpush1.bf16.msra.mxu0 0
        %1195 = vmatprep.subr.bf16.mxu0 0
        %1196 = vmatpush1.bf16.msra.mxu0 0
        %1197 = vmatprep.subr.bf16.mxu0 0
        %1198 = vmatpush1.bf16.msra.mxu0 0
        %1199 = vmatprep.subr.bf16.mxu0 0
        %1200 = vmatpush1.bf16.msra.mxu0 0
        %1201 = vmatprep.subr.bf16.mxu0 0
        %1202 = vmatpush1.bf16.msra.mxu0 0
        %1203 = vmatprep.subr.bf16.mxu0 0
        %1204 = vmatpush1.bf16.msra.mxu0 0
        %1205 = vmatprep.subr.bf16.mxu0 0
        %1206 = vmatpush1.bf16.msra.mxu0 0
        %1207 = vmatprep.subr.bf16.mxu0 0
        %1208 = vmatpush1.bf16.msra.mxu0 0
        %1209 = vmatprep.subr.bf16.mxu0 0
        %1210 = vmatpush1.bf16.msra.mxu0 0
        %1211 = vmatprep.subr.bf16.mxu0 0
        %1212 = vmatpush1.bf16.msra.mxu0 0
        %1213 = vmatprep.mubr.bf16.mxu0 0
        %1214 = vmatmul.mubr.bf16.gmra.mrb[0].mxu0 %v1176
        %v1215 = vpop.f32.mrb[0].mxu0
        %v1216 = vadd.f32 0.0, %v1215
        %v1217 = vpop.f32.mrb[0].mxu0
        %v1218 = vpop.f32.mrb[0].mxu0
        %v1219 = vpop.f32.mrb[0].mxu0
        %1220 = vdwg.mxu0
        %v1222 = vsel %vm895, %v1126, 0
        %v1225 = vsel %vm1131, %v891, 0
        %1227 = vmatprep.subr.bf16.mxu0 0
        %1228 = vmatpush1.bf16.msra.mxu0 %v1225
        %1229 = vmatprep.subr.bf16.mxu0 0
        %1230 = vmatpush1.bf16.msra.mxu0 0
        %1231 = vmatprep.subr.bf16.mxu0 0
        %1232 = vmatpush1.bf16.msra.mxu0 0
        %1233 = vmatprep.subr.bf16.mxu0 0
        %1234 = vmatpush1.bf16.msra.mxu0 0
        %1235 = vmatprep.subr.bf16.mxu0 0
        %1236 = vmatpush1.bf16.msra.mxu0 0
        %1237 = vmatprep.subr.bf16.mxu0 0
        %1238 = vmatpush1.bf16.msra.mxu0 0
        %1239 = vmatprep.subr.bf16.mxu0 0
        %1240 = vmatpush1.bf16.msra.mxu0 0
        %1241 = vmatprep.subr.bf16.mxu0 0
        %1242 = vmatpush1.bf16.msra.mxu0 0
        %1243 = vmatprep.subr.bf16.mxu0 0
        %1244 = vmatpush1.bf16.msra.mxu0 0
        %1245 = vmatprep.subr.bf16.mxu0 0
        %1246 = vmatpush1.bf16.msra.mxu0 0
        %1247 = vmatprep.subr.bf16.mxu0 0
        %1248 = vmatpush1.bf16.msra.mxu0 0
        %1249 = vmatprep.subr.bf16.mxu0 0
        %1250 = vmatpush1.bf16.msra.mxu0 0
        %1251 = vmatprep.subr.bf16.mxu0 0
        %1252 = vmatpush1.bf16.msra.mxu0 0
        %1253 = vmatprep.subr.bf16.mxu0 0
        %1254 = vmatpush1.bf16.msra.mxu0 0
        %1255 = vmatprep.subr.bf16.mxu0 0
        %1256 = vmatpush1.bf16.msra.mxu0 0
        %1257 = vmatprep.subr.bf16.mxu0 0
        %1258 = vmatpush1.bf16.msra.mxu0 0
        %1259 = vmatprep.mubr.bf16.mxu0 0
        %1260 = vmatmul.mubr.bf16.gmra.mrb[0].mxu0 %v1222
        %v1261 = vpop.f32.mrb[0].mxu0
        %v1262 = vadd.f32 0.0, %v1261
        %v1263 = vpop.f32.mrb[0].mxu0
        %v1264 = vpop.f32.mrb[0].mxu0
        %v1265 = vpop.f32.mrb[0].mxu0
        %1266 = vdwg.mxu0
        %v1268 = vsel %vm895, %v1127, 0
        %v1271 = vsel %vm1131, %v894, 0
        %1273 = vmatprep.subr.bf16.mxu0 0
        %1274 = vmatpush1.bf16.msra.mxu0 %v1271
        %1275 = vmatprep.subr.bf16.mxu0 0
        %1276 = vmatpush1.bf16.msra.mxu0 0
        %1277 = vmatprep.subr.bf16.mxu0 0
        %1278 = vmatpush1.bf16.msra.mxu0 0
        %1279 = vmatprep.subr.bf16.mxu0 0
        %1280 = vmatpush1.bf16.msra.mxu0 0
        %1281 = vmatprep.subr.bf16.mxu0 0
        %1282 = vmatpush1.bf16.msra.mxu0 0
        %1283 = vmatprep.subr.bf16.mxu0 0
        %1284 = vmatpush1.bf16.msra.mxu0 0
        %1285 = vmatprep.subr.bf16.mxu0 0
        %1286 = vmatpush1.bf16.msra.mxu0 0
        %1287 = vmatprep.subr.bf16.mxu0 0
        %1288 = vmatpush1.bf16.msra.mxu0 0
        %1289 = vmatprep.subr.bf16.mxu0 0
        %1290 = vmatpush1.bf16.msra.mxu0 0
        %1291 = vmatprep.subr.bf16.mxu0 0
        %1292 = vmatpush1.bf16.msra.mxu0 0
        %1293 = vmatprep.subr.bf16.mxu0 0
        %1294 = vmatpush1.bf16.msra.mxu0 0
        %1295 = vmatprep.subr.bf16.mxu0 0
        %1296 = vmatpush1.bf16.msra.mxu0 0
        %1297 = vmatprep.subr.bf16.mxu0 0
        %1298 = vmatpush1.bf16.msra.mxu0 0
        %1299 = vmatprep.subr.bf16.mxu0 0
        %1300 = vmatpush1.bf16.msra.mxu0 0
        %1301 = vmatprep.subr.bf16.mxu0 0
        %1302 = vmatpush1.bf16.msra.mxu0 0
        %1303 = vmatprep.subr.bf16.mxu0 0
        %1304 = vmatpush1.bf16.msra.mxu0 0
        %1305 = vmatprep.mubr.bf16.mxu0 0
        %1306 = vmatmul.mubr.bf16.gmra.mrb[0].mxu0 %v1268
        %v1307 = vpop.f32.mrb[0].mxu0
        %v1308 = vadd.f32 0.0, %v1307
        %v1309 = vpop.f32.mrb[0].mxu0
        %v1310 = vpop.f32.mrb[0].mxu0
        %v1311 = vpop.f32.mrb[0].mxu0
        %1312 = vdwg.mxu0
        %v1313 = vcombine.low %v1170, %v1262
        %v1314 = vcombine.high %v1170, %v1262
        %v1316 = vunpack.c.l.s4 1983009808
        %v1317 = vunpack.c.0.s8 %v1316
        %v1318 = vlaneseq
        %v1319 = vshrl.u32 %v1318, 7
        %v1320 = vsub.s32 %v1317, %v1319
        %v1321 = vrot.slane %v1313, %v1320
        %v1323 = vunpack.c.l.s4 1983009808
        %v1324 = vunpack.c.0.s8 %v1323
        %v1325 = vlaneseq
        %v1326 = vshrl.u32 %v1325, 7
        %v1327 = vsub.s32 %v1324, %v1326
        %v1328 = vrot.slane %v1314, %v1327
        %v1329 = vcombine.low %v1216, %v1308
        %v1330 = vcombine.high %v1216, %v1308
        %v1332 = vunpack.c.l.s4 1983009808
        %v1333 = vunpack.c.0.s8 %v1332
        %v1334 = vlaneseq
        %v1335 = vshrl.u32 %v1334, 7
        %v1336 = vsub.s32 %v1333, %v1335
        %v1337 = vrot.slane %v1329, %v1336
        %v1339 = vunpack.c.l.s4 1983009808
        %v1340 = vunpack.c.0.s8 %v1339
        %v1341 = vlaneseq
        %v1342 = vshrl.u32 %v1341, 7
        %v1343 = vsub.s32 %v1340, %v1342
        %v1344 = vrot.slane %v1330, %v1343
        %v1345 = vcombine.low %v1321, %v1337
        %v1346 = vcombine.high %v1321, %v1337
        %v1348 = vunpack.c.l.s4 1934713408
        %v1349 = vunpack.c.0.s8 %v1348
        %v1350 = vlaneseq
        %v1351 = vshrl.u32 %v1350, 7
        %v1352 = vsub.s32 %v1349, %v1351
        %v1353 = vrot.slane %v1345, %v1352
        %v1355 = vunpack.c.l.s4 1934713408
        %v1356 = vunpack.c.0.s8 %v1355
        %v1357 = vlaneseq
        %v1358 = vshrl.u32 %v1357, 7
        %v1359 = vsub.s32 %v1356, %v1358
        %v1360 = vrot.slane %v1346, %v1359
        %v1361 = vcombine.low %v1328, %v1344
        %v1362 = vcombine.high %v1328, %v1344
        %v1364 = vunpack.c.l.s4 1934713408
        %v1365 = vunpack.c.0.s8 %v1364
        %v1366 = vlaneseq
        %v1367 = vshrl.u32 %v1366, 7
        %v1368 = vsub.s32 %v1365, %v1367
        %v1369 = vrot.slane %v1361, %v1368
        %v1371 = vunpack.c.l.s4 1934713408
        %v1372 = vunpack.c.0.s8 %v1371
        %v1373 = vlaneseq
        %v1374 = vshrl.u32 %v1373, 7
        %v1375 = vsub.s32 %v1372, %v1374
        %v1376 = vrot.slane %v1362, %v1375
        %v1377 = vcombine.high %v1353, 0.0
        %v1378 = vcombine.high %v1360, 0.0
        %v1379 = vcombine.high %v1369, 0.0
        %v1380 = vcombine.high %v1376, 0.0
        %v1381 = vcombine.low %v1353, %v1360
        %v1383 = vunpack.c.l.s4 1983009808
        %v1384 = vunpack.c.0.s8 %v1383
        %v1385 = vlaneseq
        %v1386 = vshrl.u32 %v1385, 7
        %v1387 = vsub.s32 %v1384, %v1386
        %v1388 = vrot.slane %v1381, %v1387
        %v1389 = vcombine.low %v1377, %v1378
        %v1391 = vunpack.c.l.s4 1983009808
        %v1392 = vunpack.c.0.s8 %v1391
        %v1393 = vlaneseq
        %v1394 = vshrl.u32 %v1393, 7
        %v1395 = vsub.s32 %v1392, %v1394
        %v1396 = vrot.slane %v1389, %v1395
        %v1397 = vcombine.low %v1369, %v1376
        %v1399 = vunpack.c.l.s4 1983009808
        %v1400 = vunpack.c.0.s8 %v1399
        %v1401 = vlaneseq
        %v1402 = vshrl.u32 %v1401, 7
        %v1403 = vsub.s32 %v1400, %v1402
        %v1404 = vrot.slane %v1397, %v1403
        %v1405 = vcombine.low %v1379, %v1380
        %v1407 = vunpack.c.l.s4 1983009808
        %v1408 = vunpack.c.0.s8 %v1407
        %v1409 = vlaneseq
        %v1410 = vshrl.u32 %v1409, 7
        %v1411 = vsub.s32 %v1408, %v1410
        %v1412 = vrot.slane %v1405, %v1411
        %v1413 = vcombine.low %v1388, %v1396
        %v1414 = vcombine.high %v1388, %v1396
        %v1416 = vunpack.c.l.s4 1934713408
        %v1417 = vunpack.c.0.s8 %v1416
        %v1418 = vlaneseq
        %v1419 = vshrl.u32 %v1418, 7
        %v1420 = vsub.s32 %v1417, %v1419
        %v1421 = vrot.slane %v1413, %v1420
        %v1423 = vunpack.c.l.s4 1934713408
        %v1424 = vunpack.c.0.s8 %v1423
        %v1425 = vlaneseq
        %v1426 = vshrl.u32 %v1425, 7
        %v1427 = vsub.s32 %v1424, %v1426
        %v1428 = vrot.slane %v1414, %v1427
        %v1429 = vcombine.low %v1404, %v1412
        %v1430 = vcombine.high %v1404, %v1412
        %v1432 = vunpack.c.l.s4 1934713408
        %v1433 = vunpack.c.0.s8 %v1432
        %v1434 = vlaneseq
        %v1435 = vshrl.u32 %v1434, 7
        %v1436 = vsub.s32 %v1433, %v1435
        %v1437 = vrot.slane %v1429, %v1436
        %v1439 = vunpack.c.l.s4 1934713408
        %v1440 = vunpack.c.0.s8 %v1439
        %v1441 = vlaneseq
        %v1442 = vshrl.u32 %v1441, 7
        %v1443 = vsub.s32 %v1440, %v1442
        %v1444 = vrot.slane %v1430, %v1443
        %v1445 = vcombine.low %v1421, %v1437
        %v1446 = vcombine.high %v1421, %v1437
        %v1447 = vcombine.low %v1428, %v1444
        %v1448 = vcombine.high %v1428, %v1444
        %1450 = vrot.lane.b32.xlu0 %v1446, 8
        %v1451 = vpop.permute.xlu0 %1450
        %1454 = vrot.lane.b32.xlu0 %v1447, 16
        %v1455 = vpop.permute.xlu0 %1454
        %1458 = vrot.lane.b32.xlu0 %v1448, 24
        %v1459 = vpop.permute.xlu0 %1458
        %v1461 = vsel %vm895, %v1445, %v1451
        %vm1462 = vcmask 130048
        %v1463 = vsel %vm1462, %v1461, %v1455
        %vm1464 = vcmask 195584
        %v1465 = vsel %vm1464, %v1463, %v1459
        %v1466 = vpack.c.bf16 %v1465, %v1465
        %v1467 = vld [vmem:[%s3] sm:$0xf]
        %v1468 = vld [vmem:[%s3 + $0x4] sm:$0xf]
        %v1469 = vld [vmem:[%s3 + $0x8] sm:$0xf]
        %v1470 = vld [vmem:[%s3 + $0xc] sm:$0xf]
        %v1471 = vld [vmem:[%s7] sm:$0x1]
        %v1472 = vlaneseq
        %v1473 = vshrl.u32 %v1472, 7
        %v1474 = vsub.s32 0, %v1473
        %v1475 = vrot.slane %v1471, %v1474
        %v1480 = vunpack.c.l.b16 %v1467
        %v1481 = vunpack.c.l.b16 %v1468
        %v1482 = vunpack.c.l.b16 %v1469
        %v1483 = vunpack.c.l.b16 %v1470
        %v1484 = vpack.c.b16 %v1481, %v1480
        %v1485 = vpack.c.b16 %v1483, %v1482
        %v1489 = vsel %vm342, %v1466, 0
        %1491 = vmatprep.subr.bf16.mxu0 0
        %1492 = vmatpush1.bf16.msra.mxu0 %v1484
        %1493 = vmatprep.subr.bf16.mxu0 0
        %1494 = vmatpush1.bf16.msra.mxu0 %v1485
        %1495 = vmatprep.subr.bf16.mxu0 0
        %1496 = vmatpush1.bf16.msra.mxu0 0
        %1497 = vmatprep.subr.bf16.mxu0 0
        %1498 = vmatpush1.bf16.msra.mxu0 0
        %1499 = vmatprep.subr.bf16.mxu0 0
        %1500 = vmatpush1.bf16.msra.mxu0 0
        %1501 = vmatprep.subr.bf16.mxu0 0
        %1502 = vmatpush1.bf16.msra.mxu0 0
        %1503 = vmatprep.subr.bf16.mxu0 0
        %1504 = vmatpush1.bf16.msra.mxu0 0
        %1505 = vmatprep.subr.bf16.mxu0 0
        %1506 = vmatpush1.bf16.msra.mxu0 0
        %1507 = vmatprep.subr.bf16.mxu0 0
        %1508 = vmatpush1.bf16.msra.mxu0 0
        %1509 = vmatprep.subr.bf16.mxu0 0
        %1510 = vmatpush1.bf16.msra.mxu0 0
        %1511 = vmatprep.subr.bf16.mxu0 0
        %1512 = vmatpush1.bf16.msra.mxu0 0
        %1513 = vmatprep.subr.bf16.mxu0 0
        %1514 = vmatpush1.bf16.msra.mxu0 0
        %1515 = vmatprep.subr.bf16.mxu0 0
        %1516 = vmatpush1.bf16.msra.mxu0 0
        %1517 = vmatprep.subr.bf16.mxu0 0
        %1518 = vmatpush1.bf16.msra.mxu0 0
        %1519 = vmatprep.subr.bf16.mxu0 0
        %1520 = vmatpush1.bf16.msra.mxu0 0
        %1521 = vmatprep.subr.bf16.mxu0 0
        %1522 = vmatpush1.bf16.msra.mxu0 0
        %1523 = vmatprep.mubr.bf16.mxu0 0
        %1524 = vmatmul.mubr.bf16.gmra.mrb[0].mxu0 %v1489
        %v1525 = vpop.f32.mrb[0].mxu0
        %v1526 = vadd.f32 %v1475, %v1525
        %v1527 = vpop.f32.mrb[0].mxu0
        %v1528 = vpop.f32.mrb[0].mxu0
        %v1529 = vpop.f32.mrb[0].mxu0
        %1530 = vdwg.mxu0
        %v1531 = vadd.f32 %v317, %v1526
        %v1532 = vld [vmem:[%s7 + $0x1] sm:$0x1]
        %v1533 = vld [vmem:[%s7 + $0x2] sm:$0x1]
        %v1534 = vsel %vm342, %v1531, 0.0
        %1535 = vadd.xlane.f32.xlu0 %v1534
        %v1536 = vpop.xlane.xlu0 %1535
        %v1537 = vrcp.pop 32.0
        %v1538 = vmul.f32 %v1536, %v1537
        %v1539 = vsub.f32 %v1531, %v1538
        %v1540 = vmul.f32 %v1539, %v1539
        %v1541 = vsel %vm342, %v1540, 0.0
        %1542 = vadd.xlane.f32.xlu0 %v1541
        %v1543 = vpop.xlane.xlu0 %1542
        %v1544 = vmul.f32 %v1543, %v1537
        %v1545 = vadd.f32 %v1544, 1e-05
        %v1546 = vrsqrt.pop %v1545
        %v1547 = vmul.f32 %v1539, %v1546
        %v1548 = vlaneseq
        %v1549 = vshrl.u32 %v1548, 7
        %v1550 = vsub.s32 0, %v1549
        %v1551 = vrot.slane %v1532, %v1550
        %v1552 = vmul.f32 %v1547, %v1551
        %v1553 = vlaneseq
        %v1554 = vshrl.u32 %v1553, 7
        %v1555 = vsub.s32 0, %v1554
        %v1556 = vrot.slane %v1533, %v1555
        %v1557 = vadd.f32 %v1552, %v1556
        %v1558 = vpack.c.bf16 %v1557, %v1557
        %v1559 = vld [vmem:[#allocation2] sm:$0xf]
        %v1560 = vld [vmem:[#allocation2 + $0x4] sm:$0xf]
        %v1561 = vld [vmem:[#allocation2 + $0x8] sm:$0xf]
        %v1562 = vld [vmem:[#allocation2 + $0xc] sm:$0xf]
        %v1563 = vld [vmem:[%s5] sm:$0x1]
        %v1565 = vlaneseq
        %v1566 = vshrl.u32 %v1565, 7
        %v1567 = vsub.s32 0, %v1566
        %v1568 = vrot.slane %v1563, %v1567
        %v1574 = vunpack.c.l.b16 %v1559
        %v1575 = vunpack.c.l.b16 %v1560
        %v1576 = vunpack.c.l.b16 %v1561
        %v1577 = vunpack.c.l.b16 %v1562
        %v1578 = vpack.c.b16 %v1575, %v1574
        %v1579 = vpack.c.b16 %v1577, %v1576
        %v1583 = vsel %vm342, %v1558, 0
        %1585 = vmatprep.subr.bf16.mxu0 0
        %1586 = vmatpush1.bf16.msra.mxu0 %v1578
        %1587 = vmatprep.subr.bf16.mxu0 0
        %1588 = vmatpush1.bf16.msra.mxu0 %v1579
        %1589 = vmatprep.subr.bf16.mxu0 0
        %1590 = vmatpush1.bf16.msra.mxu0 0
        %1591 = vmatprep.subr.bf16.mxu0 0
        %1592 = vmatpush1.bf16.msra.mxu0 0
        %1593 = vmatprep.subr.bf16.mxu0 0
        %1594 = vmatpush1.bf16.msra.mxu0 0
        %1595 = vmatprep.subr.bf16.mxu0 0
        %1596 = vmatpush1.bf16.msra.mxu0 0
        %1597 = vmatprep.subr.bf16.mxu0 0
        %1598 = vmatpush1.bf16.msra.mxu0 0
        %1599 = vmatprep.subr.bf16.mxu0 0
        %1600 = vmatpush1.bf16.msra.mxu0 0
        %1601 = vmatprep.subr.bf16.mxu0 0
        %1602 = vmatpush1.bf16.msra.mxu0 0
        %1603 = vmatprep.subr.bf16.mxu0 0
        %1604 = vmatpush1.bf16.msra.mxu0 0
        %1605 = vmatprep.subr.bf16.mxu0 0
        %1606 = vmatpush1.bf16.msra.mxu0 0
        %1607 = vmatprep.subr.bf16.mxu0 0
        %1608 = vmatpush1.bf16.msra.mxu0 0
        %1609 = vmatprep.subr.bf16.mxu0 0
        %1610 = vmatpush1.bf16.msra.mxu0 0
        %1611 = vmatprep.subr.bf16.mxu0 0
        %1612 = vmatpush1.bf16.msra.mxu0 0
        %1613 = vmatprep.subr.bf16.mxu0 0
        %1614 = vmatpush1.bf16.msra.mxu0 0
        %1615 = vmatprep.subr.bf16.mxu0 0
        %1616 = vmatpush1.bf16.msra.mxu0 0
        %1617 = vmatprep.mubr.bf16.mxu0 0
        %1618 = vmatmul.mubr.bf16.gmra.mrb[0].mxu0 %v1583
        %v1619 = vpop.f32.mrb[0].mxu0
        %v1620 = vadd.f32 %v1568, %v1619
        %v1621 = vpop.f32.mrb[0].mxu0
        %v1622 = vpop.f32.mrb[0].mxu0
        %v1623 = vpop.f32.mrb[0].mxu0
        %1624 = vdwg.mxu0
        %v1625 = vmax.f32 %v1620, 0.0
        %v1626 = vpack.c.bf16 %v1625, %v1625
        %v1627 = vld [vmem:[%s6] sm:$0xf]
        %v1628 = vld [vmem:[%s6 + $0x4] sm:$0xf]
        %v1629 = vld [vmem:[%s6 + $0x8] sm:$0xf]
        %v1630 = vld [vmem:[%s6 + $0xc] sm:$0xf]
        %v1631 = vld [vmem:[%s6 + $0x10] sm:$0xf]
        %v1632 = vld [vmem:[%s6 + $0x14] sm:$0xf]
        %v1633 = vld [vmem:[%s6 + $0x18] sm:$0xf]
        %v1634 = vld [vmem:[%s6 + $0x1c] sm:$0xf]
        %v1635 = vld [vmem:[%s7 + $0x3] sm:$0x1]
        %v1636 = vlaneseq
        %v1637 = vshrl.u32 %v1636, 7
        %v1638 = vsub.s32 0, %v1637
        %v1639 = vrot.slane %v1635, %v1638
        %v1648 = vunpack.c.l.b16 %v1627
        %v1649 = vunpack.c.l.b16 %v1628
        %v1650 = vunpack.c.l.b16 %v1629
        %v1651 = vunpack.c.l.b16 %v1630
        %v1652 = vunpack.c.l.b16 %v1631
        %v1653 = vunpack.c.l.b16 %v1632
        %v1654 = vunpack.c.l.b16 %v1633
        %v1655 = vunpack.c.l.b16 %v1634
        %v1656 = vpack.c.b16 %v1649, %v1648
        %v1657 = vpack.c.b16 %v1651, %v1650
        %v1658 = vpack.c.b16 %v1653, %v1652
        %v1659 = vpack.c.b16 %v1655, %v1654
        %vm1664 = vcmask 523264
        %v1666 = vsel %vm1664, %v1626, 0
        %1668 = vmatprep.subr.bf16.mxu0 0
        %1669 = vmatpush1.bf16.msra.mxu0 %v1656
        %1670 = vmatprep.subr.bf16.mxu0 0
        %1671 = vmatpush1.bf16.msra.mxu0 %v1657
        %1672 = vmatprep.subr.bf16.mxu0 0
        %1673 = vmatpush1.bf16.msra.mxu0 %v1658
        %1674 = vmatprep.subr.bf16.mxu0 0
        %1675 = vmatpush1.bf16.msra.mxu0 %v1659
        %1676 = vmatprep.subr.bf16.mxu0 0
        %1677 = vmatpush1.bf16.msra.mxu0 0
        %1678 = vmatprep.subr.bf16.mxu0 0
        %1679 = vmatpush1.bf16.msra.mxu0 0
        %1680 = vmatprep.subr.bf16.mxu0 0
        %1681 = vmatpush1.bf16.msra.mxu0 0
        %1682 = vmatprep.subr.bf16.mxu0 0
        %1683 = vmatpush1.bf16.msra.mxu0 0
        %1684 = vmatprep.subr.bf16.mxu0 0
        %1685 = vmatpush1.bf16.msra.mxu0 0
        %1686 = vmatprep.subr.bf16.mxu0 0
        %1687 = vmatpush1.bf16.msra.mxu0 0
        %1688 = vmatprep.subr.bf16.mxu0 0
        %1689 = vmatpush1.bf16.msra.mxu0 0
        %1690 = vmatprep.subr.bf16.mxu0 0
        %1691 = vmatpush1.bf16.msra.mxu0 0
        %1692 = vmatprep.subr.bf16.mxu0 0
        %1693 = vmatpush1.bf16.msra.mxu0 0
        %1694 = vmatprep.subr.bf16.mxu0 0
        %1695 = vmatpush1.bf16.msra.mxu0 0
        %1696 = vmatprep.subr.bf16.mxu0 0
        %1697 = vmatpush1.bf16.msra.mxu0 0
        %1698 = vmatprep.subr.bf16.mxu0 0
        %1699 = vmatpush1.bf16.msra.mxu0 0
        %1700 = vmatprep.mubr.bf16.mxu0 0
        %1701 = vmatmul.mubr.bf16.gmra.mrb[0].mxu0 %v1666
        %v1702 = vpop.f32.mrb[0].mxu0
        %v1703 = vadd.f32 %v1639, %v1702
        %v1704 = vpop.f32.mrb[0].mxu0
        %v1705 = vpop.f32.mrb[0].mxu0
        %v1706 = vpop.f32.mrb[0].mxu0
        %1707 = vdwg.mxu0
        %v1708 = vadd.f32 %v1557, %v1703
        %v1709 = vld [vmem:[%s7 + $0x4] sm:$0x1]
        %v1710 = vld [vmem:[%s7 + $0x5] sm:$0x1]
        %v1711 = vsel %vm342, %v1708, 0.0
        %1712 = vadd.xlane.f32.xlu0 %v1711
        %v1713 = vpop.xlane.xlu0 %1712
        %v1714 = vmul.f32 %v1713, %v1537
        %v1715 = vsub.f32 %v1708, %v1714
        %v1716 = vmul.f32 %v1715, %v1715
        %v1717 = vsel %vm342, %v1716, 0.0
        %1718 = vadd.xlane.f32.xlu0 %v1717
        %v1719 = vpop.xlane.xlu0 %1718
        %v1720 = vmul.f32 %v1719, %v1537
        %v1721 = vadd.f32 %v1720, 1e-05
        %v1722 = vrsqrt.pop %v1721
        %v1723 = vmul.f32 %v1715, %v1722
        %v1724 = vlaneseq
        %v1725 = vshrl.u32 %v1724, 7
        %v1726 = vsub.s32 0, %v1725
        %v1727 = vrot.slane %v1709, %v1726
        %v1728 = vmul.f32 %v1723, %v1727
        %v1729 = vlaneseq
        %v1730 = vshrl.u32 %v1729, 7
        %v1731 = vsub.s32 0, %v1730
        %v1732 = vrot.slane %v1710, %v1731
        %v1733 = vadd.f32 %v1728, %v1732
        %1734 = vst.msk [vmem:[%s311] sm:$0xff] %vm342, %v1733
        %s1735 = sand.u32 %s204, 1
        %s1736 = scalar_lea.sflag [#allocation4], %s1735
        %s1737 = sand.u32 %s204, 1
        %s1738 = smul.addr %s1737, 8
        %s1739 = scalar_lea.vmem [#allocation5], %s1738
        // Predicated region
        $region57: #{tpu_custom_call.1} parent=51 // pred_check
          %p1740 = pneg %p214
        $region58: #{tpu_custom_call.1} parent=51 // pred_check_branch
          %1742 = sbr.rel (%p1740) target = $region60
        $region59: #{tpu_custom_call.1} parent=51 // pred_region
          %s1744 = ssub.s32 128, 128
          %1745 = vsyncadd %s1736, %s1744
          %s1746 = smul.addr %s23, 128
          %s1747 = scalar_lea.hbm %s8, %s1746
          %s1749 = sshll.u32 %s1739, 4
          %s1750 = int_to_ptr.vmem [resolvable:$true] %s1749
          %1752 = dma.vmem_to_hbm [thread:$0]  %s1750, 128, %s1747, %s1736
        $region60: #{tpu_custom_call.1} parent=51 // pred_fallthru
          _
      $region52: #{tpu_custom_call.1} parent=5 // pred_fallthru
        _
      %p1753 = scmp.le.s32.totalorder 2, %s18
      // Predicated region
      $region61: #{tpu_custom_call.1} parent=5 // pred_check
        %p1754 = pneg %p1753
      $region62: #{tpu_custom_call.1} parent=5 // pred_check_branch
        %1756 = sbr.rel (%p1754) target = $region64
      $region63: #{tpu_custom_call.1} parent=5 // pred_region
        %s1757 = ssub.s32 %s18, 2
        // Predicated region
        $region65: #{tpu_custom_call.1} parent=63 // pred_check
          %p1758 = pneg %p220
        $region66: #{tpu_custom_call.1} parent=63 // pred_check_branch
          %1760 = sbr.rel (%p1758) target = $region68
        $region67: #{tpu_custom_call.1} parent=63 // pred_region
          %s1761 = sand.u32 %s205, 1
          %s1762 = scalar_lea.sflag [#allocation4], %s1761
          %s1763 = sand.u32 %s205, 1
          %s1764 = smul.addr %s1763, 8
          %s1765 = scalar_lea.vmem [#allocation5], %s1764
          %1766 = dma.done %s1762, 128
        $region68: #{tpu_custom_call.1} parent=63 // pred_fallthru
          _
      $region64: #{tpu_custom_call.1} parent=5 // pred_fallthru
        _
    $region6: #{tpu_custom_call.1} parent=1 // loop_footer
      %s22 = sadd.s32 1, %s18
    $region7: #{tpu_custom_call.1} parent=1 // loop_footer_branch
      %17 = sbr.rel target = $region3
    $region8: #{tpu_custom_call.1} parent=1 // loop_exit
      _
    %1767 = vsyncpa [#allocation3], 1
    %s1768 = scalar_lea.sflag [#allocation3], 1
    %1769 = vsyncpa %s1768, 1
    %1770 = vsyncpa [#allocation4], 1
    %s1771 = scalar_lea.sflag [#allocation4], 1
    %1772 = vsyncpa %s1771, 1

</llo_original>
